<compile_context>
chip_gen: v7x
topology: tpu7x:2x2x1
jax: 0.10.0
libtpu: 0.0.40
codegen_flags: <defaults>
</compile_context>

<pallas_src>
import functools
import math

import jax
import jax.numpy as jnp
from jax.experimental import pallas as pl
from jax.experimental.pallas import tpu as pltpu

_SUBLANE = 8


def _lstm_kernel(x_ref, m_ref, w_ref, u_ref, b_ref, c0_ref, h0_ref,
                 hc_out_ref, xw_ref, *, backward):
    """One invocation processes the full (T, Bp) problem.

    x_ref  : (T*Bp, D)   time-major flattened inputs (batch padded to Bp)
    m_ref  : (T*Bp, H)   time-major mask, pre-broadcast over the feature axis
    w_ref  : (D, 4H)     packed [Wi|Wf|Wo|2*Wc]^T
    u_ref  : (H, 4H)     packed [Ui|Uf|Uo|2*Uc]^T
    b_ref  : (1, 4H)     packed biases (c-gate bias pre-scaled by 2)
    c0_ref, h0_ref : (Bp, H) initial state
    hc_out_ref : (T*Bp, 2H)  packed outputs — [:, :H] = h, [:, H:] = c
    xw_ref : (T*Bp, 4H) f32 scratch: hoisted input projection (+ bias folded in)
    """
    Bp, H = c0_ref.shape
    T = x_ref.shape[0] // Bp

    # (1) Hoist input projection out of the recurrence; fold the bias in here so
    #     the per-step gate expression is just xw + h@U.
    xw_ref[...] = (jnp.dot(x_ref[...], w_ref[...],
                           preferred_element_type=jnp.float32)
                   + b_ref[...])

    u = u_ref[...]          # (H, 4H), loaded once outside the loop

    def step(s_idx, carry):
        c_prev, h_prev = carry                       # (Bp, H) f32 each
        t = (T - 1 - s_idx) if backward else s_idx
        row = pl.multiple_of(t * Bp, Bp)             # Bp is a multiple of 8

        # (Bp, 4H) lane-dense packed [i | f | o | 2*c_hat_pre] pre-activations.
        gates = (xw_ref[pl.ds(row, Bp), :]
                 + jnp.dot(h_prev, u, preferred_element_type=jnp.float32))

        # One full-width sigmoid; tanh(z) = 2*sigmoid(2z) - 1 (c-gate columns
        # were pre-scaled by 2 in the wrapper).
        s = jax.nn.sigmoid(gates)
        i = s[:, 0 * H:1 * H]
        f = s[:, 1 * H:2 * H]
        o = s[:, 2 * H:3 * H]
        c_hat = 2.0 * s[:, 3 * H:4 * H] - 1.0

        c_new = i * c_hat + f * c_prev
        h_new = o * jnp.tanh(c_new)

        # fma-form masked carry; mask is already (Bp, H) lane-dense.
        m = m_ref[pl.ds(row, Bp), :]
        c = c_prev + m * (c_new - c_prev)
        h = h_prev + m * (h_new - h_prev)

        # Single packed store per timestep: [h | c] along the lane axis.
        hc_out_ref[pl.ds(row, Bp), :] = jnp.concatenate(
            [h, c], axis=1).astype(hc_out_ref.dtype)
        return (c, h)

    carry0 = (c0_ref[...].astype(jnp.float32), h0_ref[...].astype(jnp.float32))
    jax.lax.fori_loop(0, T, step, carry0, unroll=min(T, 8))


def lstm_forward(x, mask, params, s=(None, None), backward=False):
    """Pallas LSTM forward.

    x: (B, T, D) f32, mask: (B, T, 1) f32, params: dict of Wi..Wc, Ui..Uc, bi..bc.
    Returns (h_seq, c_seq), each (B, T, H) — matching the PyTorch module
    (dropout is the identity in eval mode / p=0).
    """
    B, T, D = x.shape
    H = params["Wi"].shape[0]
    c0, h0 = s
    if c0 is None:
        c0 = jnp.zeros((B, H), jnp.float32)
    if h0 is None:
        h0 = jnp.zeros((B, H), jnp.float32)

    # Pad batch to a sublane multiple; padded rows carry mask=0 (state never
    # updates, outputs discarded below).
    Bp = ((B + _SUBLANE - 1) // _SUBLANE) * _SUBLANE
    pad = Bp - B
    x_p = jnp.pad(x, ((0, pad), (0, 0), (0, 0)))
    m_p = jnp.pad(mask, ((0, pad), (0, 0), (0, 0)))
    c0_p = jnp.pad(c0, ((0, pad), (0, 0)))
    h0_p = jnp.pad(h0, ((0, pad), (0, 0)))

    # Pack per-gate weights so the in-kernel gate tile is lane-dense (last dim
    # 4H); pre-scale the c-gate by 2 so the kernel uses one wide sigmoid.
    w_packed = jnp.concatenate(
        [params["Wi"].T, params["Wf"].T, params["Wo"].T,
         2.0 * params["Wc"].T], axis=1)                                         # (D, 4H)
    u_packed = jnp.concatenate(
        [params["Ui"].T, params["Uf"].T, params["Uo"].T,
         2.0 * params["Uc"].T], axis=1)                                         # (H, 4H)
    b_packed = jnp.concatenate(
        [params["bi"], params["bf"], params["bo"],
         2.0 * params["bc"]], axis=0)[None, :]                                  # (1, 4H)

    # Time-major flatten: row index = t * Bp + b (batch on sublanes, features on
    # lanes).  Mask is pre-broadcast over H so the per-step load is lane-dense.
    x_tm = jnp.transpose(x_p, (1, 0, 2)).reshape(T * Bp, D)
    m_tm = jnp.broadcast_to(jnp.transpose(m_p, (1, 0, 2)),
                            (T, Bp, H)).reshape(T * Bp, H)

    kernel = functools.partial(_lstm_kernel, backward=backward)

    hc_tm = pl.pallas_call(
        kernel,
        out_shape=jax.ShapeDtypeStruct((T * Bp, 2 * H), x.dtype),
        grid=(1,),
        in_specs=[
            pl.BlockSpec((T * Bp, D), lambda i: (0, 0)),
            pl.BlockSpec((T * Bp, H), lambda i: (0, 0)),
            pl.BlockSpec((D, 4 * H), lambda i: (0, 0)),
            pl.BlockSpec((H, 4 * H), lambda i: (0, 0)),
            pl.BlockSpec((1, 4 * H), lambda i: (0, 0)),
            pl.BlockSpec((Bp, H), lambda i: (0, 0)),
            pl.BlockSpec((Bp, H), lambda i: (0, 0)),
        ],
        out_specs=pl.BlockSpec((T * Bp, 2 * H), lambda i: (0, 0)),
        scratch_shapes=[pltpu.VMEM((T * Bp, 4 * H), jnp.float32)],
        compiler_params=pltpu.CompilerParams(dimension_semantics=("arbitrary",)),
    )(x_tm, m_tm, w_packed, u_packed, b_packed, c0_p, h0_p)

    hc = hc_tm.reshape(T, Bp, 2 * H)
    h_seq = jnp.transpose(hc[:, :B, :H], (1, 0, 2))     # (B, T, H)
    c_seq = jnp.transpose(hc[:, :B, H:], (1, 0, 2))     # (B, T, H)
    return h_seq, c_seq


def lstm_ref(x, mask, params, s=(None, None), backward=False):
    """Pure-JAX reference mirroring the PyTorch LSTM/LSTMCell forward exactly."""
    B, T, D = x.shape
    H = params["Wi"].shape[0]
    c, h = s
    if c is None:
        c = jnp.zeros((B, H), jnp.float32)
    if h is None:
        h = jnp.zeros((B, H), jnp.float32)
    hs = [None] * T
    cs = [None] * T
    order = range(T - 1, -1, -1) if backward else range(T)
    for t in order:
        xt = x[:, t, :]
        mt = mask[:, t, :]
        i = jax.nn.sigmoid(xt @ params["Wi"].T + h @ params["Ui"].T + params["bi"])
        f = jax.nn.sigmoid(xt @ params["Wf"].T + h @ params["Uf"].T + params["bf"])
        o = jax.nn.sigmoid(xt @ params["Wo"].T + h @ params["Uo"].T + params["bo"])
        c_hat = jnp.tanh(xt @ params["Wc"].T + h @ params["Uc"].T + params["bc"])
        c_new = i * c_hat + f * c
        h_new = o * jnp.tanh(c_new)
        c = c_new * mt + c * (1.0 - mt)
        h = h_new * mt + h * (1.0 - mt)
        cs[t] = c
        hs[t] = h
    return jnp.stack(hs, axis=1), jnp.stack(cs, axis=1)


if __name__ == "__main__":
    B, T, D, H = 2, 8, 32, 32   # batch=2, seq=8, input=32, hidden=32

    key = jax.random.PRNGKey(0)
    ks = jax.random.split(key, 14)
    stdv = 1.0 / math.sqrt(H)

    def u(k, shape):
        return jax.random.uniform(k, shape, jnp.float32, -stdv, stdv)

    params = {
        "Wi": u(ks[0], (H, D)), "Wf": u(ks[1], (H, D)),
        "Wo": u(ks[2], (H, D)), "Wc": u(ks[3], (H, D)),
        "Ui": u(ks[4], (H, H)), "Uf": u(ks[5], (H, H)),
        "Uo": u(ks[6], (H, H)), "Uc": u(ks[7], (H, H)),
        "bi": u(ks[8], (H,)), "bf": u(ks[9], (H,)),
        "bo": u(ks[10], (H,)), "bc": u(ks[11], (H,)),
    }

    x = jax.random.normal(ks[12], (B, T, D), jnp.float32)
    # mask: batch 0 fully valid, batch 1 has the last 2 timesteps padded out.
    mask = jnp.ones((B, T, 1), jnp.float32)
    mask = mask.at[1, T - 2:, 0].set(0.0)

    for backward in (False, True):
        h_out, c_out = lstm_forward(x, mask, params, backward=backward)
        jax.block_until_ready((h_out, c_out))
        h_ref, c_ref = lstm_ref(x, mask, params, backward=backward)
        assert jnp.allclose(h_out, h_ref, atol=1e-4, rtol=1e-4), "h mismatch"
        assert jnp.allclose(c_out, c_ref, atol=1e-4, rtol=1e-4), "c mismatch"

    print("KERNEL_OK")
</pallas_src>

<mosaic_0001>
module attributes {stable_mosaic.version = 11 : i64} {
  func.func @_lstm_kernel(%arg0: i32, %arg1: memref<64x32xf32, #tpu.memory_space<vmem>>, %arg2: memref<64x32xf32, #tpu.memory_space<vmem>>, %arg3: memref<32x128xf32, #tpu.memory_space<vmem>>, %arg4: memref<32x128xf32, #tpu.memory_space<vmem>>, %arg5: memref<1x128xf32, #tpu.memory_space<vmem>>, %arg6: memref<8x32xf32, #tpu.memory_space<vmem>>, %arg7: memref<8x32xf32, #tpu.memory_space<vmem>>, %arg8: memref<64x64xf32, #tpu.memory_space<vmem>>, %arg9: memref<64x128xf32, #tpu.memory_space<vmem>>) attributes {dimension_semantics = [#tpu.dimension_semantics<arbitrary>], iteration_bounds = array<i64: 1>, scalar_prefetch = 0 : i64, scratch_operands = 1 : i64, tpu.core_type = #tpu.core_type<tc>, window_params = [{pipeline_mode = #tpu.pipeline_mode<synchronous>, transform_indices = @transform_0, window_bounds = array<i64: 64, 32>}, {pipeline_mode = #tpu.pipeline_mode<synchronous>, transform_indices = @transform_1, window_bounds = array<i64: 64, 32>}, {pipeline_mode = #tpu.pipeline_mode<synchronous>, transform_indices = @transform_2, window_bounds = array<i64: 32, 128>}, {pipeline_mode = #tpu.pipeline_mode<synchronous>, transform_indices = @transform_3, window_bounds = array<i64: 32, 128>}, {pipeline_mode = #tpu.pipeline_mode<synchronous>, transform_indices = @transform_4, window_bounds = array<i64: 1, 128>}, {pipeline_mode = #tpu.pipeline_mode<synchronous>, transform_indices = @transform_5, window_bounds = array<i64: 8, 32>}, {pipeline_mode = #tpu.pipeline_mode<synchronous>, transform_indices = @transform_6, window_bounds = array<i64: 8, 32>}, {pipeline_mode = #tpu.pipeline_mode<synchronous>, transform_indices = @transform_7, window_bounds = array<i64: 64, 64>}]} {
    %c0 = arith.constant 0 : index
    %c0_0 = arith.constant 0 : index
    %0 = vector.load %arg1[%c0, %c0_0] : memref<64x32xf32, #tpu.memory_space<vmem>>, vector<64x32xf32>
    %c0_1 = arith.constant 0 : index
    %c0_2 = arith.constant 0 : index
    %1 = vector.load %arg3[%c0_1, %c0_2] : memref<32x128xf32, #tpu.memory_space<vmem>>, vector<32x128xf32>
    %cst = arith.constant dense<0.000000e+00> : vector<64x128xf32>
    %2 = tpu.matmul %0, %1, %cst {dimension_numbers = #tpu.dot_dimension_numbers<[1], [0], [0], [1], [0, 0, 1, 1], [], []>} : vector<64x32xf32>, vector<32x128xf32>, vector<64x128xf32> -> vector<64x128xf32>
    %c0_3 = arith.constant 0 : index
    %c0_4 = arith.constant 0 : index
    %3 = vector.load %arg5[%c0_3, %c0_4] : memref<1x128xf32, #tpu.memory_space<vmem>>, vector<1x128xf32>
    %4 = vector.broadcast %3 : vector<1x128xf32> to vector<64x128xf32>
    %5 = arith.addf %2, %4 : vector<64x128xf32>
    %c0_5 = arith.constant 0 : index
    %c0_6 = arith.constant 0 : index
    %6 = vector.load %arg9[%c0_5, %c0_6] : memref<64x128xf32, #tpu.memory_space<vmem>>, vector<64x128xf32>
    tpu.vector_store %arg9[%c0_5, %c0_6], %5 {strides = array<i32>} : memref<64x128xf32, #tpu.memory_space<vmem>>, vector<64x128xf32>,
    %c0_7 = arith.constant 0 : index
    %c0_8 = arith.constant 0 : index
    %7 = vector.load %arg4[%c0_7, %c0_8] : memref<32x128xf32, #tpu.memory_space<vmem>>, vector<32x128xf32>
    %c0_9 = arith.constant 0 : index
    %c0_10 = arith.constant 0 : index
    %8 = vector.load %arg6[%c0_9, %c0_10] : memref<8x32xf32, #tpu.memory_space<vmem>>, vector<8x32xf32>
    %c0_11 = arith.constant 0 : index
    %c0_12 = arith.constant 0 : index
    %9 = vector.load %arg7[%c0_11, %c0_12] : memref<8x32xf32, #tpu.memory_space<vmem>>, vector<8x32xf32>
    %c0_i32 = arith.constant 0 : i32
    %c8_i32 = arith.constant 8 : i32
    %10 = arith.muli %c0_i32, %c8_i32 : i32
    %11 = tpu.assume_multiple %10, 8 : i32
    %12 = arith.index_cast %11 : i32 to index
    %c0_13 = arith.constant 0 : index
    %13 = vector.load %arg9[%12, %c0_13] : memref<64x128xf32, #tpu.memory_space<vmem>>, vector<8x128xf32>
    %cst_14 = arith.constant dense<0.000000e+00> : vector<8x128xf32>
    %14 = tpu.matmul %9, %7, %cst_14 {dimension_numbers = #tpu.dot_dimension_numbers<[1], [0], [0], [1], [0, 0, 1, 1], [], []>} : vector<8x32xf32>, vector<32x128xf32>, vector<8x128xf32> -> vector<8x128xf32>
    %15 = arith.addf %13, %14 : vector<8x128xf32>
    %16 = arith.negf %15 : vector<8x128xf32>
    %17 = math.exp %16 : vector<8x128xf32>
    %cst_15 = arith.constant 1.000000e+00 : f32
    %18 = vector.broadcast %cst_15 : f32 to vector<8x128xf32>
    %19 = arith.addf %18, %17 : vector<8x128xf32>
    %20 = arith.divf %18, %19 : vector<8x128xf32>
    %21 = vector.extract_strided_slice %20 {offsets = [0, 0], sizes = [8, 32], strides = [1, 1]} : vector<8x128xf32> to vector<8x32xf32>
    %22 = vector.extract_strided_slice %20 {offsets = [0, 32], sizes = [8, 32], strides = [1, 1]} : vector<8x128xf32> to vector<8x32xf32>
    %23 = vector.extract_strided_slice %20 {offsets = [0, 64], sizes = [8, 32], strides = [1, 1]} : vector<8x128xf32> to vector<8x32xf32>
    %24 = vector.extract_strided_slice %20 {offsets = [0, 96], sizes = [8, 32], strides = [1, 1]} : vector<8x128xf32> to vector<8x32xf32>
    %cst_16 = arith.constant 2.000000e+00 : f32
    %25 = vector.broadcast %cst_16 : f32 to vector<8x32xf32>
    %26 = arith.mulf %25, %24 : vector<8x32xf32>
    %cst_17 = arith.constant 1.000000e+00 : f32
    %27 = vector.broadcast %cst_17 : f32 to vector<8x32xf32>
    %28 = arith.subf %26, %27 : vector<8x32xf32>
    %29 = arith.mulf %21, %28 : vector<8x32xf32>
    %30 = arith.mulf %22, %8 : vector<8x32xf32>
    %31 = arith.addf %29, %30 : vector<8x32xf32>
    %32 = math.tanh %31 : vector<8x32xf32>
    %33 = arith.mulf %23, %32 : vector<8x32xf32>
    %34 = arith.index_cast %11 : i32 to index
    %c0_18 = arith.constant 0 : index
    %35 = vector.load %arg2[%34, %c0_18] : memref<64x32xf32, #tpu.memory_space<vmem>>, vector<8x32xf32>
    %36 = arith.subf %31, %8 : vector<8x32xf32>
    %37 = arith.mulf %35, %36 : vector<8x32xf32>
    %38 = arith.addf %8, %37 : vector<8x32xf32>
    %39 = arith.subf %33, %9 : vector<8x32xf32>
    %40 = arith.mulf %35, %39 : vector<8x32xf32>
    %41 = arith.addf %9, %40 : vector<8x32xf32>
    %42 = tpu.concatenate %41, %38 in 1 : vector<8x32xf32>, vector<8x32xf32> -> vector<8x64xf32>
    %43 = arith.index_cast %11 : i32 to index
    %c0_19 = arith.constant 0 : index
    %44 = vector.load %arg8[%43, %c0_19] : memref<64x64xf32, #tpu.memory_space<vmem>>, vector<8x64xf32>
    tpu.vector_store %arg8[%43, %c0_19], %42 {strides = array<i32>} : memref<64x64xf32, #tpu.memory_space<vmem>>, vector<8x64xf32>,
    %c1_i32 = arith.constant 1 : i32
    %c8_i32_20 = arith.constant 8 : i32
    %45 = arith.muli %c1_i32, %c8_i32_20 : i32
    %46 = tpu.assume_multiple %45, 8 : i32
    %47 = arith.index_cast %46 : i32 to index
    %c0_21 = arith.constant 0 : index
    %48 = vector.load %arg9[%47, %c0_21] : memref<64x128xf32, #tpu.memory_space<vmem>>, vector<8x128xf32>
    %cst_22 = arith.constant dense<0.000000e+00> : vector<8x128xf32>
    %49 = tpu.matmul %41, %7, %cst_22 {dimension_numbers = #tpu.dot_dimension_numbers<[1], [0], [0], [1], [0, 0, 1, 1], [], []>} : vector<8x32xf32>, vector<32x128xf32>, vector<8x128xf32> -> vector<8x128xf32>
    %50 = arith.addf %48, %49 : vector<8x128xf32>
    %51 = arith.negf %50 : vector<8x128xf32>
    %52 = math.exp %51 : vector<8x128xf32>
    %cst_23 = arith.constant 1.000000e+00 : f32
    %53 = vector.broadcast %cst_23 : f32 to vector<8x128xf32>
    %54 = arith.addf %53, %52 : vector<8x128xf32>
    %55 = arith.divf %53, %54 : vector<8x128xf32>
    %56 = vector.extract_strided_slice %55 {offsets = [0, 0], sizes = [8, 32], strides = [1, 1]} : vector<8x128xf32> to vector<8x32xf32>
    %57 = vector.extract_strided_slice %55 {offsets = [0, 32], sizes = [8, 32], strides = [1, 1]} : vector<8x128xf32> to vector<8x32xf32>
    %58 = vector.extract_strided_slice %55 {offsets = [0, 64], sizes = [8, 32], strides = [1, 1]} : vector<8x128xf32> to vector<8x32xf32>
    %59 = vector.extract_strided_slice %55 {offsets = [0, 96], sizes = [8, 32], strides = [1, 1]} : vector<8x128xf32> to vector<8x32xf32>
    %cst_24 = arith.constant 2.000000e+00 : f32
    %60 = vector.broadcast %cst_24 : f32 to vector<8x32xf32>
    %61 = arith.mulf %60, %59 : vector<8x32xf32>
    %cst_25 = arith.constant 1.000000e+00 : f32
    %62 = vector.broadcast %cst_25 : f32 to vector<8x32xf32>
    %63 = arith.subf %61, %62 : vector<8x32xf32>
    %64 = arith.mulf %56, %63 : vector<8x32xf32>
    %65 = arith.mulf %57, %38 : vector<8x32xf32>
    %66 = arith.addf %64, %65 : vector<8x32xf32>
    %67 = math.tanh %66 : vector<8x32xf32>
    %68 = arith.mulf %58, %67 : vector<8x32xf32>
    %69 = arith.index_cast %46 : i32 to index
    %c0_26 = arith.constant 0 : index
    %70 = vector.load %arg2[%69, %c0_26] : memref<64x32xf32, #tpu.memory_space<vmem>>, vector<8x32xf32>
    %71 = arith.subf %66, %38 : vector<8x32xf32>
    %72 = arith.mulf %70, %71 : vector<8x32xf32>
    %73 = arith.addf %38, %72 : vector<8x32xf32>
    %74 = arith.subf %68, %41 : vector<8x32xf32>
    %75 = arith.mulf %70, %74 : vector<8x32xf32>
    %76 = arith.addf %41, %75 : vector<8x32xf32>
    %77 = tpu.concatenate %76, %73 in 1 : vector<8x32xf32>, vector<8x32xf32> -> vector<8x64xf32>
    %78 = arith.index_cast %46 : i32 to index
    %c0_27 = arith.constant 0 : index
    %79 = vector.load %arg8[%78, %c0_27] : memref<64x64xf32, #tpu.memory_space<vmem>>, vector<8x64xf32>
    tpu.vector_store %arg8[%78, %c0_27], %77 {strides = array<i32>} : memref<64x64xf32, #tpu.memory_space<vmem>>, vector<8x64xf32>,
    %c2_i32 = arith.constant 2 : i32
    %c8_i32_28 = arith.constant 8 : i32
    %80 = arith.muli %c2_i32, %c8_i32_28 : i32
    %81 = tpu.assume_multiple %80, 8 : i32
    %82 = arith.index_cast %81 : i32 to index
    %c0_29 = arith.constant 0 : index
    %83 = vector.load %arg9[%82, %c0_29] : memref<64x128xf32, #tpu.memory_space<vmem>>, vector<8x128xf32>
    %cst_30 = arith.constant dense<0.000000e+00> : vector<8x128xf32>
    %84 = tpu.matmul %76, %7, %cst_30 {dimension_numbers = #tpu.dot_dimension_numbers<[1], [0], [0], [1], [0, 0, 1, 1], [], []>} : vector<8x32xf32>, vector<32x128xf32>, vector<8x128xf32> -> vector<8x128xf32>
    %85 = arith.addf %83, %84 : vector<8x128xf32>
    %86 = arith.negf %85 : vector<8x128xf32>
    %87 = math.exp %86 : vector<8x128xf32>
    %cst_31 = arith.constant 1.000000e+00 : f32
    %88 = vector.broadcast %cst_31 : f32 to vector<8x128xf32>
    %89 = arith.addf %88, %87 : vector<8x128xf32>
    %90 = arith.divf %88, %89 : vector<8x128xf32>
    %91 = vector.extract_strided_slice %90 {offsets = [0, 0], sizes = [8, 32], strides = [1, 1]} : vector<8x128xf32> to vector<8x32xf32>
    %92 = vector.extract_strided_slice %90 {offsets = [0, 32], sizes = [8, 32], strides = [1, 1]} : vector<8x128xf32> to vector<8x32xf32>
    %93 = vector.extract_strided_slice %90 {offsets = [0, 64], sizes = [8, 32], strides = [1, 1]} : vector<8x128xf32> to vector<8x32xf32>
    %94 = vector.extract_strided_slice %90 {offsets = [0, 96], sizes = [8, 32], strides = [1, 1]} : vector<8x128xf32> to vector<8x32xf32>
    %cst_32 = arith.constant 2.000000e+00 : f32
    %95 = vector.broadcast %cst_32 : f32 to vector<8x32xf32>
    %96 = arith.mulf %95, %94 : vector<8x32xf32>
    %cst_33 = arith.constant 1.000000e+00 : f32
    %97 = vector.broadcast %cst_33 : f32 to vector<8x32xf32>
    %98 = arith.subf %96, %97 : vector<8x32xf32>
    %99 = arith.mulf %91, %98 : vector<8x32xf32>
    %100 = arith.mulf %92, %73 : vector<8x32xf32>
    %101 = arith.addf %99, %100 : vector<8x32xf32>
    %102 = math.tanh %101 : vector<8x32xf32>
    %103 = arith.mulf %93, %102 : vector<8x32xf32>
    %104 = arith.index_cast %81 : i32 to index
    %c0_34 = arith.constant 0 : index
    %105 = vector.load %arg2[%104, %c0_34] : memref<64x32xf32, #tpu.memory_space<vmem>>, vector<8x32xf32>
    %106 = arith.subf %101, %73 : vector<8x32xf32>
    %107 = arith.mulf %105, %106 : vector<8x32xf32>
    %108 = arith.addf %73, %107 : vector<8x32xf32>
    %109 = arith.subf %103, %76 : vector<8x32xf32>
    %110 = arith.mulf %105, %109 : vector<8x32xf32>
    %111 = arith.addf %76, %110 : vector<8x32xf32>
    %112 = tpu.concatenate %111, %108 in 1 : vector<8x32xf32>, vector<8x32xf32> -> vector<8x64xf32>
    %113 = arith.index_cast %81 : i32 to index
    %c0_35 = arith.constant 0 : index
    %114 = vector.load %arg8[%113, %c0_35] : memref<64x64xf32, #tpu.memory_space<vmem>>, vector<8x64xf32>
    tpu.vector_store %arg8[%113, %c0_35], %112 {strides = array<i32>} : memref<64x64xf32, #tpu.memory_space<vmem>>, vector<8x64xf32>,
    %c3_i32 = arith.constant 3 : i32
    %c8_i32_36 = arith.constant 8 : i32
    %115 = arith.muli %c3_i32, %c8_i32_36 : i32
    %116 = tpu.assume_multiple %115, 8 : i32
    %117 = arith.index_cast %116 : i32 to index
    %c0_37 = arith.constant 0 : index
    %118 = vector.load %arg9[%117, %c0_37] : memref<64x128xf32, #tpu.memory_space<vmem>>, vector<8x128xf32>
    %cst_38 = arith.constant dense<0.000000e+00> : vector<8x128xf32>
    %119 = tpu.matmul %111, %7, %cst_38 {dimension_numbers = #tpu.dot_dimension_numbers<[1], [0], [0], [1], [0, 0, 1, 1], [], []>} : vector<8x32xf32>, vector<32x128xf32>, vector<8x128xf32> -> vector<8x128xf32>
    %120 = arith.addf %118, %119 : vector<8x128xf32>
    %121 = arith.negf %120 : vector<8x128xf32>
    %122 = math.exp %121 : vector<8x128xf32>
    %cst_39 = arith.constant 1.000000e+00 : f32
    %123 = vector.broadcast %cst_39 : f32 to vector<8x128xf32>
    %124 = arith.addf %123, %122 : vector<8x128xf32>
    %125 = arith.divf %123, %124 : vector<8x128xf32>
    %126 = vector.extract_strided_slice %125 {offsets = [0, 0], sizes = [8, 32], strides = [1, 1]} : vector<8x128xf32> to vector<8x32xf32>
    %127 = vector.extract_strided_slice %125 {offsets = [0, 32], sizes = [8, 32], strides = [1, 1]} : vector<8x128xf32> to vector<8x32xf32>
    %128 = vector.extract_strided_slice %125 {offsets = [0, 64], sizes = [8, 32], strides = [1, 1]} : vector<8x128xf32> to vector<8x32xf32>
    %129 = vector.extract_strided_slice %125 {offsets = [0, 96], sizes = [8, 32], strides = [1, 1]} : vector<8x128xf32> to vector<8x32xf32>
    %cst_40 = arith.constant 2.000000e+00 : f32
    %130 = vector.broadcast %cst_40 : f32 to vector<8x32xf32>
    %131 = arith.mulf %130, %129 : vector<8x32xf32>
    %cst_41 = arith.constant 1.000000e+00 : f32
    %132 = vector.broadcast %cst_41 : f32 to vector<8x32xf32>
    %133 = arith.subf %131, %132 : vector<8x32xf32>
    %134 = arith.mulf %126, %133 : vector<8x32xf32>
    %135 = arith.mulf %127, %108 : vector<8x32xf32>
    %136 = arith.addf %134, %135 : vector<8x32xf32>
    %137 = math.tanh %136 : vector<8x32xf32>
    %138 = arith.mulf %128, %137 : vector<8x32xf32>
    %139 = arith.index_cast %116 : i32 to index
    %c0_42 = arith.constant 0 : index
    %140 = vector.load %arg2[%139, %c0_42] : memref<64x32xf32, #tpu.memory_space<vmem>>, vector<8x32xf32>
    %141 = arith.subf %136, %108 : vector<8x32xf32>
    %142 = arith.mulf %140, %141 : vector<8x32xf32>
    %143 = arith.addf %108, %142 : vector<8x32xf32>
    %144 = arith.subf %138, %111 : vector<8x32xf32>
    %145 = arith.mulf %140, %144 : vector<8x32xf32>
    %146 = arith.addf %111, %145 : vector<8x32xf32>
    %147 = tpu.concatenate %146, %143 in 1 : vector<8x32xf32>, vector<8x32xf32> -> vector<8x64xf32>
    %148 = arith.index_cast %116 : i32 to index
    %c0_43 = arith.constant 0 : index
    %149 = vector.load %arg8[%148, %c0_43] : memref<64x64xf32, #tpu.memory_space<vmem>>, vector<8x64xf32>
    tpu.vector_store %arg8[%148, %c0_43], %147 {strides = array<i32>} : memref<64x64xf32, #tpu.memory_space<vmem>>, vector<8x64xf32>,
    %c4_i32 = arith.constant 4 : i32
    %c8_i32_44 = arith.constant 8 : i32
    %150 = arith.muli %c4_i32, %c8_i32_44 : i32
    %151 = tpu.assume_multiple %150, 8 : i32
    %152 = arith.index_cast %151 : i32 to index
    %c0_45 = arith.constant 0 : index
    %153 = vector.load %arg9[%152, %c0_45] : memref<64x128xf32, #tpu.memory_space<vmem>>, vector<8x128xf32>
    %cst_46 = arith.constant dense<0.000000e+00> : vector<8x128xf32>
    %154 = tpu.matmul %146, %7, %cst_46 {dimension_numbers = #tpu.dot_dimension_numbers<[1], [0], [0], [1], [0, 0, 1, 1], [], []>} : vector<8x32xf32>, vector<32x128xf32>, vector<8x128xf32> -> vector<8x128xf32>
    %155 = arith.addf %153, %154 : vector<8x128xf32>
    %156 = arith.negf %155 : vector<8x128xf32>
    %157 = math.exp %156 : vector<8x128xf32>
    %cst_47 = arith.constant 1.000000e+00 : f32
    %158 = vector.broadcast %cst_47 : f32 to vector<8x128xf32>
    %159 = arith.addf %158, %157 : vector<8x128xf32>
    %160 = arith.divf %158, %159 : vector<8x128xf32>
    %161 = vector.extract_strided_slice %160 {offsets = [0, 0], sizes = [8, 32], strides = [1, 1]} : vector<8x128xf32> to vector<8x32xf32>
    %162 = vector.extract_strided_slice %160 {offsets = [0, 32], sizes = [8, 32], strides = [1, 1]} : vector<8x128xf32> to vector<8x32xf32>
    %163 = vector.extract_strided_slice %160 {offsets = [0, 64], sizes = [8, 32], strides = [1, 1]} : vector<8x128xf32> to vector<8x32xf32>
    %164 = vector.extract_strided_slice %160 {offsets = [0, 96], sizes = [8, 32], strides = [1, 1]} : vector<8x128xf32> to vector<8x32xf32>
    %cst_48 = arith.constant 2.000000e+00 : f32
    %165 = vector.broadcast %cst_48 : f32 to vector<8x32xf32>
    %166 = arith.mulf %165, %164 : vector<8x32xf32>
    %cst_49 = arith.constant 1.000000e+00 : f32
    %167 = vector.broadcast %cst_49 : f32 to vector<8x32xf32>
    %168 = arith.subf %166, %167 : vector<8x32xf32>
    %169 = arith.mulf %161, %168 : vector<8x32xf32>
    %170 = arith.mulf %162, %143 : vector<8x32xf32>
    %171 = arith.addf %169, %170 : vector<8x32xf32>
    %172 = math.tanh %171 : vector<8x32xf32>
    %173 = arith.mulf %163, %172 : vector<8x32xf32>
    %174 = arith.index_cast %151 : i32 to index
    %c0_50 = arith.constant 0 : index
    %175 = vector.load %arg2[%174, %c0_50] : memref<64x32xf32, #tpu.memory_space<vmem>>, vector<8x32xf32>
    %176 = arith.subf %171, %143 : vector<8x32xf32>
    %177 = arith.mulf %175, %176 : vector<8x32xf32>
    %178 = arith.addf %143, %177 : vector<8x32xf32>
    %179 = arith.subf %173, %146 : vector<8x32xf32>
    %180 = arith.mulf %175, %179 : vector<8x32xf32>
    %181 = arith.addf %146, %180 : vector<8x32xf32>
    %182 = tpu.concatenate %181, %178 in 1 : vector<8x32xf32>, vector<8x32xf32> -> vector<8x64xf32>
    %183 = arith.index_cast %151 : i32 to index
    %c0_51 = arith.constant 0 : index
    %184 = vector.load %arg8[%183, %c0_51] : memref<64x64xf32, #tpu.memory_space<vmem>>, vector<8x64xf32>
    tpu.vector_store %arg8[%183, %c0_51], %182 {strides = array<i32>} : memref<64x64xf32, #tpu.memory_space<vmem>>, vector<8x64xf32>,
    %c5_i32 = arith.constant 5 : i32
    %c8_i32_52 = arith.constant 8 : i32
    %185 = arith.muli %c5_i32, %c8_i32_52 : i32
    %186 = tpu.assume_multiple %185, 8 : i32
    %187 = arith.index_cast %186 : i32 to index
    %c0_53 = arith.constant 0 : index
    %188 = vector.load %arg9[%187, %c0_53] : memref<64x128xf32, #tpu.memory_space<vmem>>, vector<8x128xf32>
    %cst_54 = arith.constant dense<0.000000e+00> : vector<8x128xf32>
    %189 = tpu.matmul %181, %7, %cst_54 {dimension_numbers = #tpu.dot_dimension_numbers<[1], [0], [0], [1], [0, 0, 1, 1], [], []>} : vector<8x32xf32>, vector<32x128xf32>, vector<8x128xf32> -> vector<8x128xf32>
    %190 = arith.addf %188, %189 : vector<8x128xf32>
    %191 = arith.negf %190 : vector<8x128xf32>
    %192 = math.exp %191 : vector<8x128xf32>
    %cst_55 = arith.constant 1.000000e+00 : f32
    %193 = vector.broadcast %cst_55 : f32 to vector<8x128xf32>
    %194 = arith.addf %193, %192 : vector<8x128xf32>
    %195 = arith.divf %193, %194 : vector<8x128xf32>
    %196 = vector.extract_strided_slice %195 {offsets = [0, 0], sizes = [8, 32], strides = [1, 1]} : vector<8x128xf32> to vector<8x32xf32>
    %197 = vector.extract_strided_slice %195 {offsets = [0, 32], sizes = [8, 32], strides = [1, 1]} : vector<8x128xf32> to vector<8x32xf32>
    %198 = vector.extract_strided_slice %195 {offsets = [0, 64], sizes = [8, 32], strides = [1, 1]} : vector<8x128xf32> to vector<8x32xf32>
    %199 = vector.extract_strided_slice %195 {offsets = [0, 96], sizes = [8, 32], strides = [1, 1]} : vector<8x128xf32> to vector<8x32xf32>
    %cst_56 = arith.constant 2.000000e+00 : f32
    %200 = vector.broadcast %cst_56 : f32 to vector<8x32xf32>
    %201 = arith.mulf %200, %199 : vector<8x32xf32>
    %cst_57 = arith.constant 1.000000e+00 : f32
    %202 = vector.broadcast %cst_57 : f32 to vector<8x32xf32>
    %203 = arith.subf %201, %202 : vector<8x32xf32>
    %204 = arith.mulf %196, %203 : vector<8x32xf32>
    %205 = arith.mulf %197, %178 : vector<8x32xf32>
    %206 = arith.addf %204, %205 : vector<8x32xf32>
    %207 = math.tanh %206 : vector<8x32xf32>
    %208 = arith.mulf %198, %207 : vector<8x32xf32>
    %209 = arith.index_cast %186 : i32 to index
    %c0_58 = arith.constant 0 : index
    %210 = vector.load %arg2[%209, %c0_58] : memref<64x32xf32, #tpu.memory_space<vmem>>, vector<8x32xf32>
    %211 = arith.subf %206, %178 : vector<8x32xf32>
    %212 = arith.mulf %210, %211 : vector<8x32xf32>
    %213 = arith.addf %178, %212 : vector<8x32xf32>
    %214 = arith.subf %208, %181 : vector<8x32xf32>
    %215 = arith.mulf %210, %214 : vector<8x32xf32>
    %216 = arith.addf %181, %215 : vector<8x32xf32>
    %217 = tpu.concatenate %216, %213 in 1 : vector<8x32xf32>, vector<8x32xf32> -> vector<8x64xf32>
    %218 = arith.index_cast %186 : i32 to index
    %c0_59 = arith.constant 0 : index
    %219 = vector.load %arg8[%218, %c0_59] : memref<64x64xf32, #tpu.memory_space<vmem>>, vector<8x64xf32>
    tpu.vector_store %arg8[%218, %c0_59], %217 {strides = array<i32>} : memref<64x64xf32, #tpu.memory_space<vmem>>, vector<8x64xf32>,
    %c6_i32 = arith.constant 6 : i32
    %c8_i32_60 = arith.constant 8 : i32
    %220 = arith.muli %c6_i32, %c8_i32_60 : i32
    %221 = tpu.assume_multiple %220, 8 : i32
    %222 = arith.index_cast %221 : i32 to index
    %c0_61 = arith.constant 0 : index
    %223 = vector.load %arg9[%222, %c0_61] : memref<64x128xf32, #tpu.memory_space<vmem>>, vector<8x128xf32>
    %cst_62 = arith.constant dense<0.000000e+00> : vector<8x128xf32>
    %224 = tpu.matmul %216, %7, %cst_62 {dimension_numbers = #tpu.dot_dimension_numbers<[1], [0], [0], [1], [0, 0, 1, 1], [], []>} : vector<8x32xf32>, vector<32x128xf32>, vector<8x128xf32> -> vector<8x128xf32>
    %225 = arith.addf %223, %224 : vector<8x128xf32>
    %226 = arith.negf %225 : vector<8x128xf32>
    %227 = math.exp %226 : vector<8x128xf32>
    %cst_63 = arith.constant 1.000000e+00 : f32
    %228 = vector.broadcast %cst_63 : f32 to vector<8x128xf32>
    %229 = arith.addf %228, %227 : vector<8x128xf32>
    %230 = arith.divf %228, %229 : vector<8x128xf32>
    %231 = vector.extract_strided_slice %230 {offsets = [0, 0], sizes = [8, 32], strides = [1, 1]} : vector<8x128xf32> to vector<8x32xf32>
    %232 = vector.extract_strided_slice %230 {offsets = [0, 32], sizes = [8, 32], strides = [1, 1]} : vector<8x128xf32> to vector<8x32xf32>
    %233 = vector.extract_strided_slice %230 {offsets = [0, 64], sizes = [8, 32], strides = [1, 1]} : vector<8x128xf32> to vector<8x32xf32>
    %234 = vector.extract_strided_slice %230 {offsets = [0, 96], sizes = [8, 32], strides = [1, 1]} : vector<8x128xf32> to vector<8x32xf32>
    %cst_64 = arith.constant 2.000000e+00 : f32
    %235 = vector.broadcast %cst_64 : f32 to vector<8x32xf32>
    %236 = arith.mulf %235, %234 : vector<8x32xf32>
    %cst_65 = arith.constant 1.000000e+00 : f32
    %237 = vector.broadcast %cst_65 : f32 to vector<8x32xf32>
    %238 = arith.subf %236, %237 : vector<8x32xf32>
    %239 = arith.mulf %231, %238 : vector<8x32xf32>
    %240 = arith.mulf %232, %213 : vector<8x32xf32>
    %241 = arith.addf %239, %240 : vector<8x32xf32>
    %242 = math.tanh %241 : vector<8x32xf32>
    %243 = arith.mulf %233, %242 : vector<8x32xf32>
    %244 = arith.index_cast %221 : i32 to index
    %c0_66 = arith.constant 0 : index
    %245 = vector.load %arg2[%244, %c0_66] : memref<64x32xf32, #tpu.memory_space<vmem>>, vector<8x32xf32>
    %246 = arith.subf %241, %213 : vector<8x32xf32>
    %247 = arith.mulf %245, %246 : vector<8x32xf32>
    %248 = arith.addf %213, %247 : vector<8x32xf32>
    %249 = arith.subf %243, %216 : vector<8x32xf32>
    %250 = arith.mulf %245, %249 : vector<8x32xf32>
    %251 = arith.addf %216, %250 : vector<8x32xf32>
    %252 = tpu.concatenate %251, %248 in 1 : vector<8x32xf32>, vector<8x32xf32> -> vector<8x64xf32>
    %253 = arith.index_cast %221 : i32 to index
    %c0_67 = arith.constant 0 : index
    %254 = vector.load %arg8[%253, %c0_67] : memref<64x64xf32, #tpu.memory_space<vmem>>, vector<8x64xf32>
    tpu.vector_store %arg8[%253, %c0_67], %252 {strides = array<i32>} : memref<64x64xf32, #tpu.memory_space<vmem>>, vector<8x64xf32>,
    %c7_i32 = arith.constant 7 : i32
    %c8_i32_68 = arith.constant 8 : i32
    %255 = arith.muli %c7_i32, %c8_i32_68 : i32
    %256 = tpu.assume_multiple %255, 8 : i32
    %257 = arith.index_cast %256 : i32 to index
    %c0_69 = arith.constant 0 : index
    %258 = vector.load %arg9[%257, %c0_69] : memref<64x128xf32, #tpu.memory_space<vmem>>, vector<8x128xf32>
    %cst_70 = arith.constant dense<0.000000e+00> : vector<8x128xf32>
    %259 = tpu.matmul %251, %7, %cst_70 {dimension_numbers = #tpu.dot_dimension_numbers<[1], [0], [0], [1], [0, 0, 1, 1], [], []>} : vector<8x32xf32>, vector<32x128xf32>, vector<8x128xf32> -> vector<8x128xf32>
    %260 = arith.addf %258, %259 : vector<8x128xf32>
    %261 = arith.negf %260 : vector<8x128xf32>
    %262 = math.exp %261 : vector<8x128xf32>
    %cst_71 = arith.constant 1.000000e+00 : f32
    %263 = vector.broadcast %cst_71 : f32 to vector<8x128xf32>
    %264 = arith.addf %263, %262 : vector<8x128xf32>
    %265 = arith.divf %263, %264 : vector<8x128xf32>
    %266 = vector.extract_strided_slice %265 {offsets = [0, 0], sizes = [8, 32], strides = [1, 1]} : vector<8x128xf32> to vector<8x32xf32>
    %267 = vector.extract_strided_slice %265 {offsets = [0, 32], sizes = [8, 32], strides = [1, 1]} : vector<8x128xf32> to vector<8x32xf32>
    %268 = vector.extract_strided_slice %265 {offsets = [0, 64], sizes = [8, 32], strides = [1, 1]} : vector<8x128xf32> to vector<8x32xf32>
    %269 = vector.extract_strided_slice %265 {offsets = [0, 96], sizes = [8, 32], strides = [1, 1]} : vector<8x128xf32> to vector<8x32xf32>
    %cst_72 = arith.constant 2.000000e+00 : f32
    %270 = vector.broadcast %cst_72 : f32 to vector<8x32xf32>
    %271 = arith.mulf %270, %269 : vector<8x32xf32>
    %cst_73 = arith.constant 1.000000e+00 : f32
    %272 = vector.broadcast %cst_73 : f32 to vector<8x32xf32>
    %273 = arith.subf %271, %272 : vector<8x32xf32>
    %274 = arith.mulf %266, %273 : vector<8x32xf32>
    %275 = arith.mulf %267, %248 : vector<8x32xf32>
    %276 = arith.addf %274, %275 : vector<8x32xf32>
    %277 = math.tanh %276 : vector<8x32xf32>
    %278 = arith.mulf %268, %277 : vector<8x32xf32>
    %279 = arith.index_cast %256 : i32 to index
    %c0_74 = arith.constant 0 : index
    %280 = vector.load %arg2[%279, %c0_74] : memref<64x32xf32, #tpu.memory_space<vmem>>, vector<8x32xf32>
    %281 = arith.subf %276, %248 : vector<8x32xf32>
    %282 = arith.mulf %280, %281 : vector<8x32xf32>
    %283 = arith.addf %248, %282 : vector<8x32xf32>
    %284 = arith.subf %278, %251 : vector<8x32xf32>
    %285 = arith.mulf %280, %284 : vector<8x32xf32>
    %286 = arith.addf %251, %285 : vector<8x32xf32>
    %287 = tpu.concatenate %286, %283 in 1 : vector<8x32xf32>, vector<8x32xf32> -> vector<8x64xf32>
    %288 = arith.index_cast %256 : i32 to index
    %c0_75 = arith.constant 0 : index
    %289 = vector.load %arg8[%288, %c0_75] : memref<64x64xf32, #tpu.memory_space<vmem>>, vector<8x64xf32>
    tpu.vector_store %arg8[%288, %c0_75], %287 {strides = array<i32>} : memref<64x64xf32, #tpu.memory_space<vmem>>, vector<8x64xf32>,
    %c8_i32_76 = arith.constant 8 : i32
    return
  }
  func.func @transform_0(%arg0: i32) -> (i32, i32) {
    %c0_i32 = arith.constant 0 : i32
    %c0_i32_0 = arith.constant 0 : i32
    %c0_i32_1 = arith.constant 0 : i32
    return %c0_i32, %c0_i32_0 : i32, i32
  }
  func.func @transform_1(%arg0: i32) -> (i32, i32) {
    %c0_i32 = arith.constant 0 : i32
    %c0_i32_0 = arith.constant 0 : i32
    %c0_i32_1 = arith.constant 0 : i32
    return %c0_i32, %c0_i32_0 : i32, i32
  }
  func.func @transform_2(%arg0: i32) -> (i32, i32) {
    %c0_i32 = arith.constant 0 : i32
    %c0_i32_0 = arith.constant 0 : i32
    %c0_i32_1 = arith.constant 0 : i32
    return %c0_i32, %c0_i32_0 : i32, i32
  }
  func.func @transform_3(%arg0: i32) -> (i32, i32) {
    %c0_i32 = arith.constant 0 : i32
    %c0_i32_0 = arith.constant 0 : i32
    %c0_i32_1 = arith.constant 0 : i32
    return %c0_i32, %c0_i32_0 : i32, i32
  }
  func.func @transform_4(%arg0: i32) -> (i32, i32) {
    %c0_i32 = arith.constant 0 : i32
    %c0_i32_0 = arith.constant 0 : i32
    %c0_i32_1 = arith.constant 0 : i32
    return %c0_i32, %c0_i32_0 : i32, i32
  }
  func.func @transform_5(%arg0: i32) -> (i32, i32) {
    %c0_i32 = arith.constant 0 : i32
    %c0_i32_0 = arith.constant 0 : i32
    %c0_i32_1 = arith.constant 0 : i32
    return %c0_i32, %c0_i32_0 : i32, i32
  }
  func.func @transform_6(%arg0: i32) -> (i32, i32) {
    %c0_i32 = arith.constant 0 : i32
    %c0_i32_0 = arith.constant 0 : i32
    %c0_i32_1 = arith.constant 0 : i32
    return %c0_i32, %c0_i32_0 : i32, i32
  }
  func.func @transform_7(%arg0: i32) -> (i32, i32) {
    %c0_i32 = arith.constant 0 : i32
    %c0_i32_0 = arith.constant 0 : i32
    %c0_i32_1 = arith.constant 0 : i32
    return %c0_i32, %c0_i32_0 : i32, i32
  }
}

</mosaic_0001>

<llo_original>
// kernel: tpu_custom_call.1
$region0: #{tpu_custom_call.1}
  #allocation0 [shape = 'u32[]', space=smem, size = 0x4, offset = 0x4, fixed_abs, tag = 'smem constant byte address 0x4 - core index']
  #allocation1 [shape = 'u32[144,128]{1,0:T(1,128)}', space=vmem, size = 0x12000, scoped, tag = 'internal scratch']
  #allocation2 [shape = 'f32[64,128]{1,0:T(8,128)}', space=vmem, size = 0x8000, scoped, tag = 'scratch operand']
  %s0 = inlined_call_operand.vmem [shape: f32[64,32], index: 0, kind: input, shape index: {}]
  %s1 = inlined_call_operand.vmem [shape: f32[64,32], index: 1, kind: input, shape index: {}]
  %s2 = inlined_call_operand.vmem [shape: f32[32,128], index: 2, kind: input, shape index: {}]
  %s3 = inlined_call_operand.vmem [shape: f32[32,128], index: 3, kind: input, shape index: {}]
  %s4 = inlined_call_operand.vmem [shape: f32[1,128], index: 4, kind: input, shape index: {}]
  %s5 = inlined_call_operand.vmem [shape: f32[8,32], index: 5, kind: input, shape index: {}]
  %s6 = inlined_call_operand.vmem [shape: f32[8,32], index: 6, kind: input, shape index: {}]
  %s7 = inlined_call_operand.hbm [shape: f32[64,64], index: 7, kind: output, shape index: {}]
  %s8 = sld [smem:[#allocation0]]
  $region38: #{tpu_custom_call.1} parent=0
    _
  %s10 = ssub.s32 1, %s8
  %s11 = scalar_select 0, %s10, %s8
  $region1: #{tpu_custom_call.1} parent=0
    #allocation3 [shape = 'u8[32768]{0}', space=vmem, size = 0x8000, scoped, tag = 'output window, operand 0, single buffered']
    #allocation4 [shape = 's32[1]{0}', space=sflag, size = 0x4, scoped, tag = 'scoped memory for tpu_custom_call.1']
    %12 = vsyncpa [#allocation4], 0
    // Predicated region
    $region2: #{tpu_custom_call.1} parent=1 // pred_check
      _
    $region3: #{tpu_custom_call.1} parent=1 // pred_check_branch
      %14 = sbr.rel (0) target = $region5
    $region4: #{tpu_custom_call.1} parent=1 // pred_region
      _
    $region5: #{tpu_custom_call.1} parent=1 // pred_fallthru
      _
    // Predicated region
    $region6: #{tpu_custom_call.1} parent=1 // pred_check
      _
    $region7: #{tpu_custom_call.1} parent=1 // pred_check_branch
      %16 = sbr.rel (0) target = $region9
    $region8: #{tpu_custom_call.1} parent=1 // pred_region
      _
    $region9: #{tpu_custom_call.1} parent=1 // pred_fallthru
      _
    // Predicated region
    $region10: #{tpu_custom_call.1} parent=1 // pred_check
      _
    $region11: #{tpu_custom_call.1} parent=1 // pred_check_branch
      %18 = sbr.rel (0) target = $region13
    $region12: #{tpu_custom_call.1} parent=1 // pred_region
      _
    $region13: #{tpu_custom_call.1} parent=1 // pred_fallthru
      _
    // Predicated region
    $region14: #{tpu_custom_call.1} parent=1 // pred_check
      _
    $region15: #{tpu_custom_call.1} parent=1 // pred_check_branch
      %20 = sbr.rel (0) target = $region17
    $region16: #{tpu_custom_call.1} parent=1 // pred_region
      _
    $region17: #{tpu_custom_call.1} parent=1 // pred_fallthru
      _
    // Predicated region
    $region18: #{tpu_custom_call.1} parent=1 // pred_check
      _
    $region19: #{tpu_custom_call.1} parent=1 // pred_check_branch
      %22 = sbr.rel (0) target = $region21
    $region20: #{tpu_custom_call.1} parent=1 // pred_region
      _
    $region21: #{tpu_custom_call.1} parent=1 // pred_fallthru
      _
    // Predicated region
    $region22: #{tpu_custom_call.1} parent=1 // pred_check
      _
    $region23: #{tpu_custom_call.1} parent=1 // pred_check_branch
      %24 = sbr.rel (0) target = $region25
    $region24: #{tpu_custom_call.1} parent=1 // pred_region
      _
    $region25: #{tpu_custom_call.1} parent=1 // pred_fallthru
      _
    // Predicated region
    $region26: #{tpu_custom_call.1} parent=1 // pred_check
      _
    $region27: #{tpu_custom_call.1} parent=1 // pred_check_branch
      %26 = sbr.rel (0) target = $region29
    $region28: #{tpu_custom_call.1} parent=1 // pred_region
      _
    $region29: #{tpu_custom_call.1} parent=1 // pred_fallthru
      _
    %v27 = vld [vmem:[%s0] sm:$0xff]
    %v28 = vld [vmem:[%s0 + $0x8] sm:$0xff]
    %v29 = vld [vmem:[%s0 + $0x10] sm:$0xff]
    %v30 = vld [vmem:[%s0 + $0x18] sm:$0xff]
    %v31 = vld [vmem:[%s0 + $0x20] sm:$0xff]
    %v32 = vld [vmem:[%s0 + $0x28] sm:$0xff]
    %v33 = vld [vmem:[%s0 + $0x30] sm:$0xff]
    %v34 = vld [vmem:[%s0 + $0x38] sm:$0xff]
    %v35 = vld [vmem:[%s2] sm:$0xff]
    %v36 = vld [vmem:[%s2 + $0x8] sm:$0xff]
    %v37 = vld [vmem:[%s2 + $0x10] sm:$0xff]
    %v38 = vld [vmem:[%s2 + $0x18] sm:$0xff]
    %v39 = vld [vmem:[%s4] sm:$0x1]
    %v41 = vlaneseq
    %v42 = vshrl.u32 %v41, 7
    %v43 = vsub.s32 0, %v42
    %v44 = vrot.slane %v39, %v43
    %vm46 = vcmask 261120
    %v48 = vsel %vm46, %v27, 0
    %v51 = vsel %vm46, %v28, 0
    %v54 = vsel %vm46, %v29, 0
    %v57 = vsel %vm46, %v30, 0
    %v60 = vsel %vm46, %v31, 0
    %v63 = vsel %vm46, %v32, 0
    %v66 = vsel %vm46, %v33, 0
    %v69 = vsel %vm46, %v34, 0
    %71 = vmatprep.subr.mxu0 0.0
    %72 = vmatpush1.msra.mxu0 %v35
    %73 = vmatprep.subr.mxu0 0.0
    %74 = vmatpush1.msra.mxu0 %v36
    %75 = vmatprep.subr.mxu0 0.0
    %76 = vmatpush1.msra.mxu0 %v37
    %77 = vmatprep.subr.mxu0 0.0
    %78 = vmatpush1.msra.mxu0 %v38
    %79 = vmatprep.subr.mxu0 0.0
    %80 = vmatpush1.msra.mxu0 0.0
    %81 = vmatprep.subr.mxu0 0.0
    %82 = vmatpush1.msra.mxu0 0.0
    %83 = vmatprep.subr.mxu0 0.0
    %84 = vmatpush1.msra.mxu0 0.0
    %85 = vmatprep.subr.mxu0 0.0
    %86 = vmatpush1.msra.mxu0 0.0
    %87 = vmatprep.subr.mxu0 0.0
    %88 = vmatpush1.msra.mxu0 0.0
    %89 = vmatprep.subr.mxu0 0.0
    %90 = vmatpush1.msra.mxu0 0.0
    %91 = vmatprep.subr.mxu0 0.0
    %92 = vmatpush1.msra.mxu0 0.0
    %93 = vmatprep.subr.mxu0 0.0
    %94 = vmatpush1.msra.mxu0 0.0
    %95 = vmatprep.subr.mxu0 0.0
    %96 = vmatpush1.msra.mxu0 0.0
    %97 = vmatprep.subr.mxu0 0.0
    %98 = vmatpush1.msra.mxu0 0.0
    %99 = vmatprep.subr.mxu0 0.0
    %100 = vmatpush1.msra.mxu0 0.0
    %101 = vmatprep.subr.mxu0 0.0
    %102 = vmatpush1.msra.mxu0 0.0
    %103 = vmatprep.subr.mxu0 0.0
    %104 = vmatpush1.msra.mxu0 0.0
    %105 = vmatprep.subr.mxu0 0.0
    %106 = vmatpush1.msra.mxu0 0.0
    %107 = vmatprep.subr.mxu0 0.0
    %108 = vmatpush1.msra.mxu0 0.0
    %109 = vmatprep.subr.mxu0 0.0
    %110 = vmatpush1.msra.mxu0 0.0
    %111 = vmatprep.subr.mxu0 0.0
    %112 = vmatpush1.msra.mxu0 0.0
    %113 = vmatprep.subr.mxu0 0.0
    %114 = vmatpush1.msra.mxu0 0.0
    %115 = vmatprep.subr.mxu0 0.0
    %116 = vmatpush1.msra.mxu0 0.0
    %117 = vmatprep.subr.mxu0 0.0
    %118 = vmatpush1.msra.mxu0 0.0
    %119 = vmatprep.subr.mxu0 0.0
    %120 = vmatpush1.msra.mxu0 0.0
    %121 = vmatprep.subr.mxu0 0.0
    %122 = vmatpush1.msra.mxu0 0.0
    %123 = vmatprep.subr.mxu0 0.0
    %124 = vmatpush1.msra.mxu0 0.0
    %125 = vmatprep.subr.mxu0 0.0
    %126 = vmatpush1.msra.mxu0 0.0
    %127 = vmatprep.subr.mxu0 0.0
    %128 = vmatpush1.msra.mxu0 0.0
    %129 = vmatprep.subr.mxu0 0.0
    %130 = vmatpush1.msra.mxu0 0.0
    %131 = vmatprep.subr.mxu0 0.0
    %132 = vmatpush1.msra.mxu0 0.0
    %133 = vmatprep.subr.mxu0 0.0
    %134 = vmatpush1.msra.mxu0 0.0
    %135 = vmatprep.mubr.f32.mxu0 0.0
    %136 = vmatmul.mubr.f32.gmra.mrb[0].mxu0 %v48
    %v137 = vpop.f32.mrb[0].mxu0
    %v138 = vadd.f32 %v44, %v137
    %v139 = vpop.f32.mrb[0].mxu0
    %140 = vmatprep.mubr.f32.mxu0 0.0
    %141 = vmatmul.mubr.f32.gmra.mrb[0].mxu0 %v51
    %v142 = vpop.f32.mrb[0].mxu0
    %v143 = vadd.f32 %v44, %v142
    %v144 = vpop.f32.mrb[0].mxu0
    %145 = vmatprep.mubr.f32.mxu0 0.0
    %146 = vmatmul.mubr.f32.gmra.mrb[0].mxu0 %v54
    %v147 = vpop.f32.mrb[0].mxu0
    %v148 = vadd.f32 %v44, %v147
    %v149 = vpop.f32.mrb[0].mxu0
    %150 = vmatprep.mubr.f32.mxu0 0.0
    %151 = vmatmul.mubr.f32.gmra.mrb[0].mxu0 %v57
    %v152 = vpop.f32.mrb[0].mxu0
    %v153 = vadd.f32 %v44, %v152
    %v154 = vpop.f32.mrb[0].mxu0
    %155 = vmatprep.mubr.f32.mxu0 0.0
    %156 = vmatmul.mubr.f32.gmra.mrb[0].mxu0 %v60
    %v157 = vpop.f32.mrb[0].mxu0
    %v158 = vadd.f32 %v44, %v157
    %v159 = vpop.f32.mrb[0].mxu0
    %160 = vmatprep.mubr.f32.mxu0 0.0
    %161 = vmatmul.mubr.f32.gmra.mrb[0].mxu0 %v63
    %v162 = vpop.f32.mrb[0].mxu0
    %v163 = vadd.f32 %v44, %v162
    %v164 = vpop.f32.mrb[0].mxu0
    %165 = vmatprep.mubr.f32.mxu0 0.0
    %166 = vmatmul.mubr.f32.gmra.mrb[0].mxu0 %v66
    %v167 = vpop.f32.mrb[0].mxu0
    %v168 = vadd.f32 %v44, %v167
    %v169 = vpop.f32.mrb[0].mxu0
    %170 = vmatprep.mubr.f32.mxu0 0.0
    %171 = vmatmul.mubr.f32.gmra.mrb[0].mxu0 %v69
    %v172 = vpop.f32.mrb[0].mxu0
    %v173 = vadd.f32 %v44, %v172
    %v174 = vpop.f32.mrb[0].mxu0
    %175 = vdwg.mxu0
    %176 = vst [vmem:[#allocation2] sm:$0xff] %v138
    %177 = vst [vmem:[#allocation2 + $0x8] sm:$0xff] %v143
    %178 = vst [vmem:[#allocation2 + $0x10] sm:$0xff] %v148
    %179 = vst [vmem:[#allocation2 + $0x18] sm:$0xff] %v153
    %180 = vst [vmem:[#allocation2 + $0x20] sm:$0xff] %v158
    %181 = vst [vmem:[#allocation2 + $0x28] sm:$0xff] %v163
    %182 = vst [vmem:[#allocation2 + $0x30] sm:$0xff] %v168
    %183 = vst [vmem:[#allocation2 + $0x38] sm:$0xff] %v173
    %v184 = vld [vmem:[%s3] sm:$0xff]
    %v185 = vld [vmem:[%s3 + $0x8] sm:$0xff]
    %v186 = vld [vmem:[%s3 + $0x10] sm:$0xff]
    %v187 = vld [vmem:[%s3 + $0x18] sm:$0xff]
    %v188 = vld [vmem:[%s5] sm:$0xff]
    %v189 = vld [vmem:[%s6] sm:$0xff]
    %v190 = vld [vmem:[#allocation2] sm:$0xff]
    %v192 = vsel %vm46, %v189, 0
    %194 = vmatprep.subr.mxu0 0.0
    %195 = vmatpush1.msra.mxu0 %v184
    %196 = vmatprep.subr.mxu0 0.0
    %197 = vmatpush1.msra.mxu0 %v185
    %198 = vmatprep.subr.mxu0 0.0
    %199 = vmatpush1.msra.mxu0 %v186
    %200 = vmatprep.subr.mxu0 0.0
    %201 = vmatpush1.msra.mxu0 %v187
    %202 = vmatprep.subr.mxu0 0.0
    %203 = vmatpush1.msra.mxu0 0.0
    %204 = vmatprep.subr.mxu0 0.0
    %205 = vmatpush1.msra.mxu0 0.0
    %206 = vmatprep.subr.mxu0 0.0
    %207 = vmatpush1.msra.mxu0 0.0
    %208 = vmatprep.subr.mxu0 0.0
    %209 = vmatpush1.msra.mxu0 0.0
    %210 = vmatprep.subr.mxu0 0.0
    %211 = vmatpush1.msra.mxu0 0.0
    %212 = vmatprep.subr.mxu0 0.0
    %213 = vmatpush1.msra.mxu0 0.0
    %214 = vmatprep.subr.mxu0 0.0
    %215 = vmatpush1.msra.mxu0 0.0
    %216 = vmatprep.subr.mxu0 0.0
    %217 = vmatpush1.msra.mxu0 0.0
    %218 = vmatprep.subr.mxu0 0.0
    %219 = vmatpush1.msra.mxu0 0.0
    %220 = vmatprep.subr.mxu0 0.0
    %221 = vmatpush1.msra.mxu0 0.0
    %222 = vmatprep.subr.mxu0 0.0
    %223 = vmatpush1.msra.mxu0 0.0
    %224 = vmatprep.subr.mxu0 0.0
    %225 = vmatpush1.msra.mxu0 0.0
    %226 = vmatprep.subr.mxu0 0.0
    %227 = vmatpush1.msra.mxu0 0.0
    %228 = vmatprep.subr.mxu0 0.0
    %229 = vmatpush1.msra.mxu0 0.0
    %230 = vmatprep.subr.mxu0 0.0
    %231 = vmatpush1.msra.mxu0 0.0
    %232 = vmatprep.subr.mxu0 0.0
    %233 = vmatpush1.msra.mxu0 0.0
    %234 = vmatprep.subr.mxu0 0.0
    %235 = vmatpush1.msra.mxu0 0.0
    %236 = vmatprep.subr.mxu0 0.0
    %237 = vmatpush1.msra.mxu0 0.0
    %238 = vmatprep.subr.mxu0 0.0
    %239 = vmatpush1.msra.mxu0 0.0
    %240 = vmatprep.subr.mxu0 0.0
    %241 = vmatpush1.msra.mxu0 0.0
    %242 = vmatprep.subr.mxu0 0.0
    %243 = vmatpush1.msra.mxu0 0.0
    %244 = vmatprep.subr.mxu0 0.0
    %245 = vmatpush1.msra.mxu0 0.0
    %246 = vmatprep.subr.mxu0 0.0
    %247 = vmatpush1.msra.mxu0 0.0
    %248 = vmatprep.subr.mxu0 0.0
    %249 = vmatpush1.msra.mxu0 0.0
    %250 = vmatprep.subr.mxu0 0.0
    %251 = vmatpush1.msra.mxu0 0.0
    %252 = vmatprep.subr.mxu0 0.0
    %253 = vmatpush1.msra.mxu0 0.0
    %254 = vmatprep.subr.mxu0 0.0
    %255 = vmatpush1.msra.mxu0 0.0
    %256 = vmatprep.subr.mxu0 0.0
    %257 = vmatpush1.msra.mxu0 0.0
    %258 = vmatprep.mubr.f32.mxu0 0.0
    %259 = vmatmul.mubr.f32.gmra.mrb[0].mxu0 %v192
    %v260 = vpop.f32.mrb[0].mxu0
    %v261 = vadd.f32 0.0, %v260
    %v262 = vpop.f32.mrb[0].mxu0
    %263 = vdwg.mxu0
    %v264 = vadd.f32 %v190, %v261
    %v265 = vxor.u32 %v264, 2147483648
    %v266 = vmul.f32 %v265, 1.442695
    %v267 = vpow.pop %v266
    %v268 = vadd.f32 %v267, 1.0
    %v269 = vrcp.pop %v268
    %v270 = vmul.f32 1.0, %v269
    %v271 = vmul.f32 %v270, 2.0
    %v272 = vsub.f32 %v271, 1.0
    %274 = vrot.lane.b32.xlu0 %v272, 32
    %v275 = vpop.permute.xlu0 %274
    %v277 = vmul.f32 %v270, %v275
    %279 = vrot.lane.b32.xlu0 %v188, 32
    %v280 = vpop.permute.xlu0 %279
    %v282 = vmul.f32 %v270, %v280
    %284 = vrot.lane.b32.xlu0 %v282, 96
    %v285 = vpop.permute.xlu0 %284
    %v287 = vadd.f32 %v277, %v285
    %v288 = vtanh.pop %v287
    %290 = vrot.lane.b32.xlu0 %v288, 64
    %v291 = vpop.permute.xlu0 %290
    %v293 = vmul.f32 %v270, %v291
    %v294 = vld [vmem:[%s1] sm:$0xff]
    %v295 = vsub.f32 %v287, %v188
    %v296 = vmul.f32 %v294, %v295
    %v297 = vadd.f32 %v188, %v296
    %298 = vrot.lane.b32.xlu0 %v189, 64
    %v299 = vpop.permute.xlu0 %298
    %v301 = vsub.f32 %v293, %v299
    %303 = vrot.lane.b32.xlu0 %v301, 64
    %v304 = vpop.permute.xlu0 %303
    %v306 = vmul.f32 %v294, %v304
    %v307 = vadd.f32 %v189, %v306
    %309 = vrot.lane.b32.xlu0 %v297, 32
    %v310 = vpop.permute.xlu0 %309
    %v312 = vsel %vm46, %v307, %v310
    %vm313 = vcmask 523264
    %314 = vst.msk [vmem:[#allocation3] sm:$0xff] %vm313, %v312
    %s315 = scalar_lea.vmem [#allocation2], 8
    %v316 = vld [vmem:[%s315] sm:$0xff]
    %v318 = vsel %vm46, %v307, 0
    %320 = vmatprep.subr.mxu0 0.0
    %321 = vmatpush1.msra.mxu0 %v184
    %322 = vmatprep.subr.mxu0 0.0
    %323 = vmatpush1.msra.mxu0 %v185
    %324 = vmatprep.subr.mxu0 0.0
    %325 = vmatpush1.msra.mxu0 %v186
    %326 = vmatprep.subr.mxu0 0.0
    %327 = vmatpush1.msra.mxu0 %v187
    %328 = vmatprep.subr.mxu0 0.0
    %329 = vmatpush1.msra.mxu0 0.0
    %330 = vmatprep.subr.mxu0 0.0
    %331 = vmatpush1.msra.mxu0 0.0
    %332 = vmatprep.subr.mxu0 0.0
    %333 = vmatpush1.msra.mxu0 0.0
    %334 = vmatprep.subr.mxu0 0.0
    %335 = vmatpush1.msra.mxu0 0.0
    %336 = vmatprep.subr.mxu0 0.0
    %337 = vmatpush1.msra.mxu0 0.0
    %338 = vmatprep.subr.mxu0 0.0
    %339 = vmatpush1.msra.mxu0 0.0
    %340 = vmatprep.subr.mxu0 0.0
    %341 = vmatpush1.msra.mxu0 0.0
    %342 = vmatprep.subr.mxu0 0.0
    %343 = vmatpush1.msra.mxu0 0.0
    %344 = vmatprep.subr.mxu0 0.0
    %345 = vmatpush1.msra.mxu0 0.0
    %346 = vmatprep.subr.mxu0 0.0
    %347 = vmatpush1.msra.mxu0 0.0
    %348 = vmatprep.subr.mxu0 0.0
    %349 = vmatpush1.msra.mxu0 0.0
    %350 = vmatprep.subr.mxu0 0.0
    %351 = vmatpush1.msra.mxu0 0.0
    %352 = vmatprep.subr.mxu0 0.0
    %353 = vmatpush1.msra.mxu0 0.0
    %354 = vmatprep.subr.mxu0 0.0
    %355 = vmatpush1.msra.mxu0 0.0
    %356 = vmatprep.subr.mxu0 0.0
    %357 = vmatpush1.msra.mxu0 0.0
    %358 = vmatprep.subr.mxu0 0.0
    %359 = vmatpush1.msra.mxu0 0.0
    %360 = vmatprep.subr.mxu0 0.0
    %361 = vmatpush1.msra.mxu0 0.0
    %362 = vmatprep.subr.mxu0 0.0
    %363 = vmatpush1.msra.mxu0 0.0
    %364 = vmatprep.subr.mxu0 0.0
    %365 = vmatpush1.msra.mxu0 0.0
    %366 = vmatprep.subr.mxu0 0.0
    %367 = vmatpush1.msra.mxu0 0.0
    %368 = vmatprep.subr.mxu0 0.0
    %369 = vmatpush1.msra.mxu0 0.0
    %370 = vmatprep.subr.mxu0 0.0
    %371 = vmatpush1.msra.mxu0 0.0
    %372 = vmatprep.subr.mxu0 0.0
    %373 = vmatpush1.msra.mxu0 0.0
    %374 = vmatprep.subr.mxu0 0.0
    %375 = vmatpush1.msra.mxu0 0.0
    %376 = vmatprep.subr.mxu0 0.0
    %377 = vmatpush1.msra.mxu0 0.0
    %378 = vmatprep.subr.mxu0 0.0
    %379 = vmatpush1.msra.mxu0 0.0
    %380 = vmatprep.subr.mxu0 0.0
    %381 = vmatpush1.msra.mxu0 0.0
    %382 = vmatprep.subr.mxu0 0.0
    %383 = vmatpush1.msra.mxu0 0.0
    %384 = vmatprep.mubr.f32.mxu0 0.0
    %385 = vmatmul.mubr.f32.gmra.mrb[0].mxu0 %v318
    %v386 = vpop.f32.mrb[0].mxu0
    %v387 = vadd.f32 0.0, %v386
    %v388 = vpop.f32.mrb[0].mxu0
    %389 = vdwg.mxu0
    %v390 = vadd.f32 %v316, %v387
    %v391 = vxor.u32 %v390, 2147483648
    %v392 = vmul.f32 %v391, 1.442695
    %v393 = vpow.pop %v392
    %v394 = vadd.f32 %v393, 1.0
    %v395 = vrcp.pop %v394
    %v396 = vmul.f32 1.0, %v395
    %v397 = vmul.f32 %v396, 2.0
    %v398 = vsub.f32 %v397, 1.0
    %400 = vrot.lane.b32.xlu0 %v398, 32
    %v401 = vpop.permute.xlu0 %400
    %v403 = vmul.f32 %v396, %v401
    %v404 = vmul.f32 %v396, %v310
    %406 = vrot.lane.b32.xlu0 %v404, 96
    %v407 = vpop.permute.xlu0 %406
    %v409 = vadd.f32 %v403, %v407
    %v410 = vtanh.pop %v409
    %412 = vrot.lane.b32.xlu0 %v410, 64
    %v413 = vpop.permute.xlu0 %412
    %v415 = vmul.f32 %v396, %v413
    %s416 = scalar_lea.vmem %s1, 8
    %v417 = vld [vmem:[%s416] sm:$0xff]
    %v418 = vsub.f32 %v409, %v297
    %v419 = vmul.f32 %v417, %v418
    %v420 = vadd.f32 %v297, %v419
    %421 = vrot.lane.b32.xlu0 %v307, 64
    %v422 = vpop.permute.xlu0 %421
    %v424 = vsub.f32 %v415, %v422
    %426 = vrot.lane.b32.xlu0 %v424, 64
    %v427 = vpop.permute.xlu0 %426
    %v429 = vmul.f32 %v417, %v427
    %v430 = vadd.f32 %v307, %v429
    %432 = vrot.lane.b32.xlu0 %v420, 32
    %v433 = vpop.permute.xlu0 %432
    %v435 = vsel %vm46, %v430, %v433
    %s436 = scalar_lea.vmem [#allocation3], 8
    %437 = vst.msk [vmem:[%s436] sm:$0xff] %vm313, %v435
    %s438 = scalar_lea.vmem [#allocation2], 16
    %v439 = vld [vmem:[%s438] sm:$0xff]
    %v441 = vsel %vm46, %v430, 0
    %443 = vmatprep.subr.mxu0 0.0
    %444 = vmatpush1.msra.mxu0 %v184
    %445 = vmatprep.subr.mxu0 0.0
    %446 = vmatpush1.msra.mxu0 %v185
    %447 = vmatprep.subr.mxu0 0.0
    %448 = vmatpush1.msra.mxu0 %v186
    %449 = vmatprep.subr.mxu0 0.0
    %450 = vmatpush1.msra.mxu0 %v187
    %451 = vmatprep.subr.mxu0 0.0
    %452 = vmatpush1.msra.mxu0 0.0
    %453 = vmatprep.subr.mxu0 0.0
    %454 = vmatpush1.msra.mxu0 0.0
    %455 = vmatprep.subr.mxu0 0.0
    %456 = vmatpush1.msra.mxu0 0.0
    %457 = vmatprep.subr.mxu0 0.0
    %458 = vmatpush1.msra.mxu0 0.0
    %459 = vmatprep.subr.mxu0 0.0
    %460 = vmatpush1.msra.mxu0 0.0
    %461 = vmatprep.subr.mxu0 0.0
    %462 = vmatpush1.msra.mxu0 0.0
    %463 = vmatprep.subr.mxu0 0.0
    %464 = vmatpush1.msra.mxu0 0.0
    %465 = vmatprep.subr.mxu0 0.0
    %466 = vmatpush1.msra.mxu0 0.0
    %467 = vmatprep.subr.mxu0 0.0
    %468 = vmatpush1.msra.mxu0 0.0
    %469 = vmatprep.subr.mxu0 0.0
    %470 = vmatpush1.msra.mxu0 0.0
    %471 = vmatprep.subr.mxu0 0.0
    %472 = vmatpush1.msra.mxu0 0.0
    %473 = vmatprep.subr.mxu0 0.0
    %474 = vmatpush1.msra.mxu0 0.0
    %475 = vmatprep.subr.mxu0 0.0
    %476 = vmatpush1.msra.mxu0 0.0
    %477 = vmatprep.subr.mxu0 0.0
    %478 = vmatpush1.msra.mxu0 0.0
    %479 = vmatprep.subr.mxu0 0.0
    %480 = vmatpush1.msra.mxu0 0.0
    %481 = vmatprep.subr.mxu0 0.0
    %482 = vmatpush1.msra.mxu0 0.0
    %483 = vmatprep.subr.mxu0 0.0
    %484 = vmatpush1.msra.mxu0 0.0
    %485 = vmatprep.subr.mxu0 0.0
    %486 = vmatpush1.msra.mxu0 0.0
    %487 = vmatprep.subr.mxu0 0.0
    %488 = vmatpush1.msra.mxu0 0.0
    %489 = vmatprep.subr.mxu0 0.0
    %490 = vmatpush1.msra.mxu0 0.0
    %491 = vmatprep.subr.mxu0 0.0
    %492 = vmatpush1.msra.mxu0 0.0
    %493 = vmatprep.subr.mxu0 0.0
    %494 = vmatpush1.msra.mxu0 0.0
    %495 = vmatprep.subr.mxu0 0.0
    %496 = vmatpush1.msra.mxu0 0.0
    %497 = vmatprep.subr.mxu0 0.0
    %498 = vmatpush1.msra.mxu0 0.0
    %499 = vmatprep.subr.mxu0 0.0
    %500 = vmatpush1.msra.mxu0 0.0
    %501 = vmatprep.subr.mxu0 0.0
    %502 = vmatpush1.msra.mxu0 0.0
    %503 = vmatprep.subr.mxu0 0.0
    %504 = vmatpush1.msra.mxu0 0.0
    %505 = vmatprep.subr.mxu0 0.0
    %506 = vmatpush1.msra.mxu0 0.0
    %507 = vmatprep.mubr.f32.mxu0 0.0
    %508 = vmatmul.mubr.f32.gmra.mrb[0].mxu0 %v441
    %v509 = vpop.f32.mrb[0].mxu0
    %v510 = vadd.f32 0.0, %v509
    %v511 = vpop.f32.mrb[0].mxu0
    %512 = vdwg.mxu0
    %v513 = vadd.f32 %v439, %v510
    %v514 = vxor.u32 %v513, 2147483648
    %v515 = vmul.f32 %v514, 1.442695
    %v516 = vpow.pop %v515
    %v517 = vadd.f32 %v516, 1.0
    %v518 = vrcp.pop %v517
    %v519 = vmul.f32 1.0, %v518
    %v520 = vmul.f32 %v519, 2.0
    %v521 = vsub.f32 %v520, 1.0
    %523 = vrot.lane.b32.xlu0 %v521, 32
    %v524 = vpop.permute.xlu0 %523
    %v526 = vmul.f32 %v519, %v524
    %v527 = vmul.f32 %v519, %v433
    %529 = vrot.lane.b32.xlu0 %v527, 96
    %v530 = vpop.permute.xlu0 %529
    %v532 = vadd.f32 %v526, %v530
    %v533 = vtanh.pop %v532
    %535 = vrot.lane.b32.xlu0 %v533, 64
    %v536 = vpop.permute.xlu0 %535
    %v538 = vmul.f32 %v519, %v536
    %s539 = scalar_lea.vmem %s1, 16
    %v540 = vld [vmem:[%s539] sm:$0xff]
    %v541 = vsub.f32 %v532, %v420
    %v542 = vmul.f32 %v540, %v541
    %v543 = vadd.f32 %v420, %v542
    %544 = vrot.lane.b32.xlu0 %v430, 64
    %v545 = vpop.permute.xlu0 %544
    %v547 = vsub.f32 %v538, %v545
    %549 = vrot.lane.b32.xlu0 %v547, 64
    %v550 = vpop.permute.xlu0 %549
    %v552 = vmul.f32 %v540, %v550
    %v553 = vadd.f32 %v430, %v552
    %555 = vrot.lane.b32.xlu0 %v543, 32
    %v556 = vpop.permute.xlu0 %555
    %v558 = vsel %vm46, %v553, %v556
    %s559 = scalar_lea.vmem [#allocation3], 16
    %560 = vst.msk [vmem:[%s559] sm:$0xff] %vm313, %v558
    %s561 = scalar_lea.vmem [#allocation2], 24
    %v562 = vld [vmem:[%s561] sm:$0xff]
    %v564 = vsel %vm46, %v553, 0
    %566 = vmatprep.subr.mxu0 0.0
    %567 = vmatpush1.msra.mxu0 %v184
    %568 = vmatprep.subr.mxu0 0.0
    %569 = vmatpush1.msra.mxu0 %v185
    %570 = vmatprep.subr.mxu0 0.0
    %571 = vmatpush1.msra.mxu0 %v186
    %572 = vmatprep.subr.mxu0 0.0
    %573 = vmatpush1.msra.mxu0 %v187
    %574 = vmatprep.subr.mxu0 0.0
    %575 = vmatpush1.msra.mxu0 0.0
    %576 = vmatprep.subr.mxu0 0.0
    %577 = vmatpush1.msra.mxu0 0.0
    %578 = vmatprep.subr.mxu0 0.0
    %579 = vmatpush1.msra.mxu0 0.0
    %580 = vmatprep.subr.mxu0 0.0
    %581 = vmatpush1.msra.mxu0 0.0
    %582 = vmatprep.subr.mxu0 0.0
    %583 = vmatpush1.msra.mxu0 0.0
    %584 = vmatprep.subr.mxu0 0.0
    %585 = vmatpush1.msra.mxu0 0.0
    %586 = vmatprep.subr.mxu0 0.0
    %587 = vmatpush1.msra.mxu0 0.0
    %588 = vmatprep.subr.mxu0 0.0
    %589 = vmatpush1.msra.mxu0 0.0
    %590 = vmatprep.subr.mxu0 0.0
    %591 = vmatpush1.msra.mxu0 0.0
    %592 = vmatprep.subr.mxu0 0.0
    %593 = vmatpush1.msra.mxu0 0.0
    %594 = vmatprep.subr.mxu0 0.0
    %595 = vmatpush1.msra.mxu0 0.0
    %596 = vmatprep.subr.mxu0 0.0
    %597 = vmatpush1.msra.mxu0 0.0
    %598 = vmatprep.subr.mxu0 0.0
    %599 = vmatpush1.msra.mxu0 0.0
    %600 = vmatprep.subr.mxu0 0.0
    %601 = vmatpush1.msra.mxu0 0.0
    %602 = vmatprep.subr.mxu0 0.0
    %603 = vmatpush1.msra.mxu0 0.0
    %604 = vmatprep.subr.mxu0 0.0
    %605 = vmatpush1.msra.mxu0 0.0
    %606 = vmatprep.subr.mxu0 0.0
    %607 = vmatpush1.msra.mxu0 0.0
    %608 = vmatprep.subr.mxu0 0.0
    %609 = vmatpush1.msra.mxu0 0.0
    %610 = vmatprep.subr.mxu0 0.0
    %611 = vmatpush1.msra.mxu0 0.0
    %612 = vmatprep.subr.mxu0 0.0
    %613 = vmatpush1.msra.mxu0 0.0
    %614 = vmatprep.subr.mxu0 0.0
    %615 = vmatpush1.msra.mxu0 0.0
    %616 = vmatprep.subr.mxu0 0.0
    %617 = vmatpush1.msra.mxu0 0.0
    %618 = vmatprep.subr.mxu0 0.0
    %619 = vmatpush1.msra.mxu0 0.0
    %620 = vmatprep.subr.mxu0 0.0
    %621 = vmatpush1.msra.mxu0 0.0
    %622 = vmatprep.subr.mxu0 0.0
    %623 = vmatpush1.msra.mxu0 0.0
    %624 = vmatprep.subr.mxu0 0.0
    %625 = vmatpush1.msra.mxu0 0.0
    %626 = vmatprep.subr.mxu0 0.0
    %627 = vmatpush1.msra.mxu0 0.0
    %628 = vmatprep.subr.mxu0 0.0
    %629 = vmatpush1.msra.mxu0 0.0
    %630 = vmatprep.mubr.f32.mxu0 0.0
    %631 = vmatmul.mubr.f32.gmra.mrb[0].mxu0 %v564
    %v632 = vpop.f32.mrb[0].mxu0
    %v633 = vadd.f32 0.0, %v632
    %v634 = vpop.f32.mrb[0].mxu0
    %635 = vdwg.mxu0
    %v636 = vadd.f32 %v562, %v633
    %v637 = vxor.u32 %v636, 2147483648
    %v638 = vmul.f32 %v637, 1.442695
    %v639 = vpow.pop %v638
    %v640 = vadd.f32 %v639, 1.0
    %v641 = vrcp.pop %v640
    %v642 = vmul.f32 1.0, %v641
    %v643 = vmul.f32 %v642, 2.0
    %v644 = vsub.f32 %v643, 1.0
    %646 = vrot.lane.b32.xlu0 %v644, 32
    %v647 = vpop.permute.xlu0 %646
    %v649 = vmul.f32 %v642, %v647
    %v650 = vmul.f32 %v642, %v556
    %652 = vrot.lane.b32.xlu0 %v650, 96
    %v653 = vpop.permute.xlu0 %652
    %v655 = vadd.f32 %v649, %v653
    %v656 = vtanh.pop %v655
    %658 = vrot.lane.b32.xlu0 %v656, 64
    %v659 = vpop.permute.xlu0 %658
    %v661 = vmul.f32 %v642, %v659
    %s662 = scalar_lea.vmem %s1, 24
    %v663 = vld [vmem:[%s662] sm:$0xff]
    %v664 = vsub.f32 %v655, %v543
    %v665 = vmul.f32 %v663, %v664
    %v666 = vadd.f32 %v543, %v665
    %667 = vrot.lane.b32.xlu0 %v553, 64
    %v668 = vpop.permute.xlu0 %667
    %v670 = vsub.f32 %v661, %v668
    %672 = vrot.lane.b32.xlu0 %v670, 64
    %v673 = vpop.permute.xlu0 %672
    %v675 = vmul.f32 %v663, %v673
    %v676 = vadd.f32 %v553, %v675
    %678 = vrot.lane.b32.xlu0 %v666, 32
    %v679 = vpop.permute.xlu0 %678
    %v681 = vsel %vm46, %v676, %v679
    %s682 = scalar_lea.vmem [#allocation3], 24
    %683 = vst.msk [vmem:[%s682] sm:$0xff] %vm313, %v681
    %s684 = scalar_lea.vmem [#allocation2], 32
    %v685 = vld [vmem:[%s684] sm:$0xff]
    %v687 = vsel %vm46, %v676, 0
    %689 = vmatprep.subr.mxu0 0.0
    %690 = vmatpush1.msra.mxu0 %v184
    %691 = vmatprep.subr.mxu0 0.0
    %692 = vmatpush1.msra.mxu0 %v185
    %693 = vmatprep.subr.mxu0 0.0
    %694 = vmatpush1.msra.mxu0 %v186
    %695 = vmatprep.subr.mxu0 0.0
    %696 = vmatpush1.msra.mxu0 %v187
    %697 = vmatprep.subr.mxu0 0.0
    %698 = vmatpush1.msra.mxu0 0.0
    %699 = vmatprep.subr.mxu0 0.0
    %700 = vmatpush1.msra.mxu0 0.0
    %701 = vmatprep.subr.mxu0 0.0
    %702 = vmatpush1.msra.mxu0 0.0
    %703 = vmatprep.subr.mxu0 0.0
    %704 = vmatpush1.msra.mxu0 0.0
    %705 = vmatprep.subr.mxu0 0.0
    %706 = vmatpush1.msra.mxu0 0.0
    %707 = vmatprep.subr.mxu0 0.0
    %708 = vmatpush1.msra.mxu0 0.0
    %709 = vmatprep.subr.mxu0 0.0
    %710 = vmatpush1.msra.mxu0 0.0
    %711 = vmatprep.subr.mxu0 0.0
    %712 = vmatpush1.msra.mxu0 0.0
    %713 = vmatprep.subr.mxu0 0.0
    %714 = vmatpush1.msra.mxu0 0.0
    %715 = vmatprep.subr.mxu0 0.0
    %716 = vmatpush1.msra.mxu0 0.0
    %717 = vmatprep.subr.mxu0 0.0
    %718 = vmatpush1.msra.mxu0 0.0
    %719 = vmatprep.subr.mxu0 0.0
    %720 = vmatpush1.msra.mxu0 0.0
    %721 = vmatprep.subr.mxu0 0.0
    %722 = vmatpush1.msra.mxu0 0.0
    %723 = vmatprep.subr.mxu0 0.0
    %724 = vmatpush1.msra.mxu0 0.0
    %725 = vmatprep.subr.mxu0 0.0
    %726 = vmatpush1.msra.mxu0 0.0
    %727 = vmatprep.subr.mxu0 0.0
    %728 = vmatpush1.msra.mxu0 0.0
    %729 = vmatprep.subr.mxu0 0.0
    %730 = vmatpush1.msra.mxu0 0.0
    %731 = vmatprep.subr.mxu0 0.0
    %732 = vmatpush1.msra.mxu0 0.0
    %733 = vmatprep.subr.mxu0 0.0
    %734 = vmatpush1.msra.mxu0 0.0
    %735 = vmatprep.subr.mxu0 0.0
    %736 = vmatpush1.msra.mxu0 0.0
    %737 = vmatprep.subr.mxu0 0.0
    %738 = vmatpush1.msra.mxu0 0.0
    %739 = vmatprep.subr.mxu0 0.0
    %740 = vmatpush1.msra.mxu0 0.0
    %741 = vmatprep.subr.mxu0 0.0
    %742 = vmatpush1.msra.mxu0 0.0
    %743 = vmatprep.subr.mxu0 0.0
    %744 = vmatpush1.msra.mxu0 0.0
    %745 = vmatprep.subr.mxu0 0.0
    %746 = vmatpush1.msra.mxu0 0.0
    %747 = vmatprep.subr.mxu0 0.0
    %748 = vmatpush1.msra.mxu0 0.0
    %749 = vmatprep.subr.mxu0 0.0
    %750 = vmatpush1.msra.mxu0 0.0
    %751 = vmatprep.subr.mxu0 0.0
    %752 = vmatpush1.msra.mxu0 0.0
    %753 = vmatprep.mubr.f32.mxu0 0.0
    %754 = vmatmul.mubr.f32.gmra.mrb[0].mxu0 %v687
    %v755 = vpop.f32.mrb[0].mxu0
    %v756 = vadd.f32 0.0, %v755
    %v757 = vpop.f32.mrb[0].mxu0
    %758 = vdwg.mxu0
    %v759 = vadd.f32 %v685, %v756
    %v760 = vxor.u32 %v759, 2147483648
    %v761 = vmul.f32 %v760, 1.442695
    %v762 = vpow.pop %v761
    %v763 = vadd.f32 %v762, 1.0
    %v764 = vrcp.pop %v763
    %v765 = vmul.f32 1.0, %v764
    %v766 = vmul.f32 %v765, 2.0
    %v767 = vsub.f32 %v766, 1.0
    %769 = vrot.lane.b32.xlu0 %v767, 32
    %v770 = vpop.permute.xlu0 %769
    %v772 = vmul.f32 %v765, %v770
    %v773 = vmul.f32 %v765, %v679
    %775 = vrot.lane.b32.xlu0 %v773, 96
    %v776 = vpop.permute.xlu0 %775
    %v778 = vadd.f32 %v772, %v776
    %v779 = vtanh.pop %v778
    %781 = vrot.lane.b32.xlu0 %v779, 64
    %v782 = vpop.permute.xlu0 %781
    %v784 = vmul.f32 %v765, %v782
    %s785 = scalar_lea.vmem %s1, 32
    %v786 = vld [vmem:[%s785] sm:$0xff]
    %v787 = vsub.f32 %v778, %v666
    %v788 = vmul.f32 %v786, %v787
    %v789 = vadd.f32 %v666, %v788
    %790 = vrot.lane.b32.xlu0 %v676, 64
    %v791 = vpop.permute.xlu0 %790
    %v793 = vsub.f32 %v784, %v791
    %795 = vrot.lane.b32.xlu0 %v793, 64
    %v796 = vpop.permute.xlu0 %795
    %v798 = vmul.f32 %v786, %v796
    %v799 = vadd.f32 %v676, %v798
    %801 = vrot.lane.b32.xlu0 %v789, 32
    %v802 = vpop.permute.xlu0 %801
    %v804 = vsel %vm46, %v799, %v802
    %s805 = scalar_lea.vmem [#allocation3], 32
    %806 = vst.msk [vmem:[%s805] sm:$0xff] %vm313, %v804
    %s807 = scalar_lea.vmem [#allocation2], 40
    %v808 = vld [vmem:[%s807] sm:$0xff]
    %v810 = vsel %vm46, %v799, 0
    %812 = vmatprep.subr.mxu0 0.0
    %813 = vmatpush1.msra.mxu0 %v184
    %814 = vmatprep.subr.mxu0 0.0
    %815 = vmatpush1.msra.mxu0 %v185
    %816 = vmatprep.subr.mxu0 0.0
    %817 = vmatpush1.msra.mxu0 %v186
    %818 = vmatprep.subr.mxu0 0.0
    %819 = vmatpush1.msra.mxu0 %v187
    %820 = vmatprep.subr.mxu0 0.0
    %821 = vmatpush1.msra.mxu0 0.0
    %822 = vmatprep.subr.mxu0 0.0
    %823 = vmatpush1.msra.mxu0 0.0
    %824 = vmatprep.subr.mxu0 0.0
    %825 = vmatpush1.msra.mxu0 0.0
    %826 = vmatprep.subr.mxu0 0.0
    %827 = vmatpush1.msra.mxu0 0.0
    %828 = vmatprep.subr.mxu0 0.0
    %829 = vmatpush1.msra.mxu0 0.0
    %830 = vmatprep.subr.mxu0 0.0
    %831 = vmatpush1.msra.mxu0 0.0
    %832 = vmatprep.subr.mxu0 0.0
    %833 = vmatpush1.msra.mxu0 0.0
    %834 = vmatprep.subr.mxu0 0.0
    %835 = vmatpush1.msra.mxu0 0.0
    %836 = vmatprep.subr.mxu0 0.0
    %837 = vmatpush1.msra.mxu0 0.0
    %838 = vmatprep.subr.mxu0 0.0
    %839 = vmatpush1.msra.mxu0 0.0
    %840 = vmatprep.subr.mxu0 0.0
    %841 = vmatpush1.msra.mxu0 0.0
    %842 = vmatprep.subr.mxu0 0.0
    %843 = vmatpush1.msra.mxu0 0.0
    %844 = vmatprep.subr.mxu0 0.0
    %845 = vmatpush1.msra.mxu0 0.0
    %846 = vmatprep.subr.mxu0 0.0
    %847 = vmatpush1.msra.mxu0 0.0
    %848 = vmatprep.subr.mxu0 0.0
    %849 = vmatpush1.msra.mxu0 0.0
    %850 = vmatprep.subr.mxu0 0.0
    %851 = vmatpush1.msra.mxu0 0.0
    %852 = vmatprep.subr.mxu0 0.0
    %853 = vmatpush1.msra.mxu0 0.0
    %854 = vmatprep.subr.mxu0 0.0
    %855 = vmatpush1.msra.mxu0 0.0
    %856 = vmatprep.subr.mxu0 0.0
    %857 = vmatpush1.msra.mxu0 0.0
    %858 = vmatprep.subr.mxu0 0.0
    %859 = vmatpush1.msra.mxu0 0.0
    %860 = vmatprep.subr.mxu0 0.0
    %861 = vmatpush1.msra.mxu0 0.0
    %862 = vmatprep.subr.mxu0 0.0
    %863 = vmatpush1.msra.mxu0 0.0
    %864 = vmatprep.subr.mxu0 0.0
    %865 = vmatpush1.msra.mxu0 0.0
    %866 = vmatprep.subr.mxu0 0.0
    %867 = vmatpush1.msra.mxu0 0.0
    %868 = vmatprep.subr.mxu0 0.0
    %869 = vmatpush1.msra.mxu0 0.0
    %870 = vmatprep.subr.mxu0 0.0
    %871 = vmatpush1.msra.mxu0 0.0
    %872 = vmatprep.subr.mxu0 0.0
    %873 = vmatpush1.msra.mxu0 0.0
    %874 = vmatprep.subr.mxu0 0.0
    %875 = vmatpush1.msra.mxu0 0.0
    %876 = vmatprep.mubr.f32.mxu0 0.0
    %877 = vmatmul.mubr.f32.gmra.mrb[0].mxu0 %v810
    %v878 = vpop.f32.mrb[0].mxu0
    %v879 = vadd.f32 0.0, %v878
    %v880 = vpop.f32.mrb[0].mxu0
    %881 = vdwg.mxu0
    %v882 = vadd.f32 %v808, %v879
    %v883 = vxor.u32 %v882, 2147483648
    %v884 = vmul.f32 %v883, 1.442695
    %v885 = vpow.pop %v884
    %v886 = vadd.f32 %v885, 1.0
    %v887 = vrcp.pop %v886
    %v888 = vmul.f32 1.0, %v887
    %v889 = vmul.f32 %v888, 2.0
    %v890 = vsub.f32 %v889, 1.0
    %892 = vrot.lane.b32.xlu0 %v890, 32
    %v893 = vpop.permute.xlu0 %892
    %v895 = vmul.f32 %v888, %v893
    %v896 = vmul.f32 %v888, %v802
    %898 = vrot.lane.b32.xlu0 %v896, 96
    %v899 = vpop.permute.xlu0 %898
    %v901 = vadd.f32 %v895, %v899
    %v902 = vtanh.pop %v901
    %904 = vrot.lane.b32.xlu0 %v902, 64
    %v905 = vpop.permute.xlu0 %904
    %v907 = vmul.f32 %v888, %v905
    %s908 = scalar_lea.vmem %s1, 40
    %v909 = vld [vmem:[%s908] sm:$0xff]
    %v910 = vsub.f32 %v901, %v789
    %v911 = vmul.f32 %v909, %v910
    %v912 = vadd.f32 %v789, %v911
    %913 = vrot.lane.b32.xlu0 %v799, 64
    %v914 = vpop.permute.xlu0 %913
    %v916 = vsub.f32 %v907, %v914
    %918 = vrot.lane.b32.xlu0 %v916, 64
    %v919 = vpop.permute.xlu0 %918
    %v921 = vmul.f32 %v909, %v919
    %v922 = vadd.f32 %v799, %v921
    %924 = vrot.lane.b32.xlu0 %v912, 32
    %v925 = vpop.permute.xlu0 %924
    %v927 = vsel %vm46, %v922, %v925
    %s928 = scalar_lea.vmem [#allocation3], 40
    %929 = vst.msk [vmem:[%s928] sm:$0xff] %vm313, %v927
    %s930 = scalar_lea.vmem [#allocation2], 48
    %v931 = vld [vmem:[%s930] sm:$0xff]
    %v933 = vsel %vm46, %v922, 0
    %935 = vmatprep.subr.mxu0 0.0
    %936 = vmatpush1.msra.mxu0 %v184
    %937 = vmatprep.subr.mxu0 0.0
    %938 = vmatpush1.msra.mxu0 %v185
    %939 = vmatprep.subr.mxu0 0.0
    %940 = vmatpush1.msra.mxu0 %v186
    %941 = vmatprep.subr.mxu0 0.0
    %942 = vmatpush1.msra.mxu0 %v187
    %943 = vmatprep.subr.mxu0 0.0
    %944 = vmatpush1.msra.mxu0 0.0
    %945 = vmatprep.subr.mxu0 0.0
    %946 = vmatpush1.msra.mxu0 0.0
    %947 = vmatprep.subr.mxu0 0.0
    %948 = vmatpush1.msra.mxu0 0.0
    %949 = vmatprep.subr.mxu0 0.0
    %950 = vmatpush1.msra.mxu0 0.0
    %951 = vmatprep.subr.mxu0 0.0
    %952 = vmatpush1.msra.mxu0 0.0
    %953 = vmatprep.subr.mxu0 0.0
    %954 = vmatpush1.msra.mxu0 0.0
    %955 = vmatprep.subr.mxu0 0.0
    %956 = vmatpush1.msra.mxu0 0.0
    %957 = vmatprep.subr.mxu0 0.0
    %958 = vmatpush1.msra.mxu0 0.0
    %959 = vmatprep.subr.mxu0 0.0
    %960 = vmatpush1.msra.mxu0 0.0
    %961 = vmatprep.subr.mxu0 0.0
    %962 = vmatpush1.msra.mxu0 0.0
    %963 = vmatprep.subr.mxu0 0.0
    %964 = vmatpush1.msra.mxu0 0.0
    %965 = vmatprep.subr.mxu0 0.0
    %966 = vmatpush1.msra.mxu0 0.0
    %967 = vmatprep.subr.mxu0 0.0
    %968 = vmatpush1.msra.mxu0 0.0
    %969 = vmatprep.subr.mxu0 0.0
    %970 = vmatpush1.msra.mxu0 0.0
    %971 = vmatprep.subr.mxu0 0.0
    %972 = vmatpush1.msra.mxu0 0.0
    %973 = vmatprep.subr.mxu0 0.0
    %974 = vmatpush1.msra.mxu0 0.0
    %975 = vmatprep.subr.mxu0 0.0
    %976 = vmatpush1.msra.mxu0 0.0
    %977 = vmatprep.subr.mxu0 0.0
    %978 = vmatpush1.msra.mxu0 0.0
    %979 = vmatprep.subr.mxu0 0.0
    %980 = vmatpush1.msra.mxu0 0.0
    %981 = vmatprep.subr.mxu0 0.0
    %982 = vmatpush1.msra.mxu0 0.0
    %983 = vmatprep.subr.mxu0 0.0
    %984 = vmatpush1.msra.mxu0 0.0
    %985 = vmatprep.subr.mxu0 0.0
    %986 = vmatpush1.msra.mxu0 0.0
    %987 = vmatprep.subr.mxu0 0.0
    %988 = vmatpush1.msra.mxu0 0.0
    %989 = vmatprep.subr.mxu0 0.0
    %990 = vmatpush1.msra.mxu0 0.0
    %991 = vmatprep.subr.mxu0 0.0
    %992 = vmatpush1.msra.mxu0 0.0
    %993 = vmatprep.subr.mxu0 0.0
    %994 = vmatpush1.msra.mxu0 0.0
    %995 = vmatprep.subr.mxu0 0.0
    %996 = vmatpush1.msra.mxu0 0.0
    %997 = vmatprep.subr.mxu0 0.0
    %998 = vmatpush1.msra.mxu0 0.0
    %999 = vmatprep.mubr.f32.mxu0 0.0
    %1000 = vmatmul.mubr.f32.gmra.mrb[0].mxu0 %v933
    %v1001 = vpop.f32.mrb[0].mxu0
    %v1002 = vadd.f32 0.0, %v1001
    %v1003 = vpop.f32.mrb[0].mxu0
    %1004 = vdwg.mxu0
    %v1005 = vadd.f32 %v931, %v1002
    %v1006 = vxor.u32 %v1005, 2147483648
    %v1007 = vmul.f32 %v1006, 1.442695
    %v1008 = vpow.pop %v1007
    %v1009 = vadd.f32 %v1008, 1.0
    %v1010 = vrcp.pop %v1009
    %v1011 = vmul.f32 1.0, %v1010
    %v1012 = vmul.f32 %v1011, 2.0
    %v1013 = vsub.f32 %v1012, 1.0
    %1015 = vrot.lane.b32.xlu0 %v1013, 32
    %v1016 = vpop.permute.xlu0 %1015
    %v1018 = vmul.f32 %v1011, %v1016
    %v1019 = vmul.f32 %v1011, %v925
    %1021 = vrot.lane.b32.xlu0 %v1019, 96
    %v1022 = vpop.permute.xlu0 %1021
    %v1024 = vadd.f32 %v1018, %v1022
    %v1025 = vtanh.pop %v1024
    %1027 = vrot.lane.b32.xlu0 %v1025, 64
    %v1028 = vpop.permute.xlu0 %1027
    %v1030 = vmul.f32 %v1011, %v1028
    %s1031 = scalar_lea.vmem %s1, 48
    %v1032 = vld [vmem:[%s1031] sm:$0xff]
    %v1033 = vsub.f32 %v1024, %v912
    %v1034 = vmul.f32 %v1032, %v1033
    %v1035 = vadd.f32 %v912, %v1034
    %1036 = vrot.lane.b32.xlu0 %v922, 64
    %v1037 = vpop.permute.xlu0 %1036
    %v1039 = vsub.f32 %v1030, %v1037
    %1041 = vrot.lane.b32.xlu0 %v1039, 64
    %v1042 = vpop.permute.xlu0 %1041
    %v1044 = vmul.f32 %v1032, %v1042
    %v1045 = vadd.f32 %v922, %v1044
    %1047 = vrot.lane.b32.xlu0 %v1035, 32
    %v1048 = vpop.permute.xlu0 %1047
    %v1050 = vsel %vm46, %v1045, %v1048
    %s1051 = scalar_lea.vmem [#allocation3], 48
    %1052 = vst.msk [vmem:[%s1051] sm:$0xff] %vm313, %v1050
    %s1053 = scalar_lea.vmem [#allocation2], 56
    %v1054 = vld [vmem:[%s1053] sm:$0xff]
    %v1056 = vsel %vm46, %v1045, 0
    %1058 = vmatprep.subr.mxu0 0.0
    %1059 = vmatpush1.msra.mxu0 %v184
    %1060 = vmatprep.subr.mxu0 0.0
    %1061 = vmatpush1.msra.mxu0 %v185
    %1062 = vmatprep.subr.mxu0 0.0
    %1063 = vmatpush1.msra.mxu0 %v186
    %1064 = vmatprep.subr.mxu0 0.0
    %1065 = vmatpush1.msra.mxu0 %v187
    %1066 = vmatprep.subr.mxu0 0.0
    %1067 = vmatpush1.msra.mxu0 0.0
    %1068 = vmatprep.subr.mxu0 0.0
    %1069 = vmatpush1.msra.mxu0 0.0
    %1070 = vmatprep.subr.mxu0 0.0
    %1071 = vmatpush1.msra.mxu0 0.0
    %1072 = vmatprep.subr.mxu0 0.0
    %1073 = vmatpush1.msra.mxu0 0.0
    %1074 = vmatprep.subr.mxu0 0.0
    %1075 = vmatpush1.msra.mxu0 0.0
    %1076 = vmatprep.subr.mxu0 0.0
    %1077 = vmatpush1.msra.mxu0 0.0
    %1078 = vmatprep.subr.mxu0 0.0
    %1079 = vmatpush1.msra.mxu0 0.0
    %1080 = vmatprep.subr.mxu0 0.0
    %1081 = vmatpush1.msra.mxu0 0.0
    %1082 = vmatprep.subr.mxu0 0.0
    %1083 = vmatpush1.msra.mxu0 0.0
    %1084 = vmatprep.subr.mxu0 0.0
    %1085 = vmatpush1.msra.mxu0 0.0
    %1086 = vmatprep.subr.mxu0 0.0
    %1087 = vmatpush1.msra.mxu0 0.0
    %1088 = vmatprep.subr.mxu0 0.0
    %1089 = vmatpush1.msra.mxu0 0.0
    %1090 = vmatprep.subr.mxu0 0.0
    %1091 = vmatpush1.msra.mxu0 0.0
    %1092 = vmatprep.subr.mxu0 0.0
    %1093 = vmatpush1.msra.mxu0 0.0
    %1094 = vmatprep.subr.mxu0 0.0
    %1095 = vmatpush1.msra.mxu0 0.0
    %1096 = vmatprep.subr.mxu0 0.0
    %1097 = vmatpush1.msra.mxu0 0.0
    %1098 = vmatprep.subr.mxu0 0.0
    %1099 = vmatpush1.msra.mxu0 0.0
    %1100 = vmatprep.subr.mxu0 0.0
    %1101 = vmatpush1.msra.mxu0 0.0
    %1102 = vmatprep.subr.mxu0 0.0
    %1103 = vmatpush1.msra.mxu0 0.0
    %1104 = vmatprep.subr.mxu0 0.0
    %1105 = vmatpush1.msra.mxu0 0.0
    %1106 = vmatprep.subr.mxu0 0.0
    %1107 = vmatpush1.msra.mxu0 0.0
    %1108 = vmatprep.subr.mxu0 0.0
    %1109 = vmatpush1.msra.mxu0 0.0
    %1110 = vmatprep.subr.mxu0 0.0
    %1111 = vmatpush1.msra.mxu0 0.0
    %1112 = vmatprep.subr.mxu0 0.0
    %1113 = vmatpush1.msra.mxu0 0.0
    %1114 = vmatprep.subr.mxu0 0.0
    %1115 = vmatpush1.msra.mxu0 0.0
    %1116 = vmatprep.subr.mxu0 0.0
    %1117 = vmatpush1.msra.mxu0 0.0
    %1118 = vmatprep.subr.mxu0 0.0
    %1119 = vmatpush1.msra.mxu0 0.0
    %1120 = vmatprep.subr.mxu0 0.0
    %1121 = vmatpush1.msra.mxu0 0.0
    %1122 = vmatprep.mubr.f32.mxu0 0.0
    %1123 = vmatmul.mubr.f32.gmra.mrb[0].mxu0 %v1056
    %v1124 = vpop.f32.mrb[0].mxu0
    %v1125 = vadd.f32 0.0, %v1124
    %v1126 = vpop.f32.mrb[0].mxu0
    %1127 = vdwg.mxu0
    %v1128 = vadd.f32 %v1054, %v1125
    %v1129 = vxor.u32 %v1128, 2147483648
    %v1130 = vmul.f32 %v1129, 1.442695
    %v1131 = vpow.pop %v1130
    %v1132 = vadd.f32 %v1131, 1.0
    %v1133 = vrcp.pop %v1132
    %v1134 = vmul.f32 1.0, %v1133
    %v1135 = vmul.f32 %v1134, 2.0
    %v1136 = vsub.f32 %v1135, 1.0
    %1138 = vrot.lane.b32.xlu0 %v1136, 32
    %v1139 = vpop.permute.xlu0 %1138
    %v1141 = vmul.f32 %v1134, %v1139
    %v1142 = vmul.f32 %v1134, %v1048
    %1144 = vrot.lane.b32.xlu0 %v1142, 96
    %v1145 = vpop.permute.xlu0 %1144
    %v1147 = vadd.f32 %v1141, %v1145
    %v1148 = vtanh.pop %v1147
    %1150 = vrot.lane.b32.xlu0 %v1148, 64
    %v1151 = vpop.permute.xlu0 %1150
    %v1153 = vmul.f32 %v1134, %v1151
    %s1154 = scalar_lea.vmem %s1, 56
    %v1155 = vld [vmem:[%s1154] sm:$0xff]
    %v1156 = vsub.f32 %v1147, %v1035
    %v1157 = vmul.f32 %v1155, %v1156
    %v1158 = vadd.f32 %v1035, %v1157
    %1159 = vrot.lane.b32.xlu0 %v1045, 64
    %v1160 = vpop.permute.xlu0 %1159
    %v1162 = vsub.f32 %v1153, %v1160
    %1164 = vrot.lane.b32.xlu0 %v1162, 64
    %v1165 = vpop.permute.xlu0 %1164
    %v1167 = vmul.f32 %v1155, %v1165
    %v1168 = vadd.f32 %v1045, %v1167
    %1170 = vrot.lane.b32.xlu0 %v1158, 32
    %v1171 = vpop.permute.xlu0 %1170
    %v1173 = vsel %vm46, %v1168, %v1171
    %s1174 = scalar_lea.vmem [#allocation3], 56
    %1175 = vst.msk [vmem:[%s1174] sm:$0xff] %vm313, %v1173
    // Predicated region
    $region30: #{tpu_custom_call.1} parent=1 // pred_check
      _
    $region31: #{tpu_custom_call.1} parent=1 // pred_check_branch
      %1177 = sbr.rel (0) target = $region33
    $region32: #{tpu_custom_call.1} parent=1 // pred_region
      %s1179 = ssub.s32 1024, 1024
      %1180 = vsyncadd [#allocation4], %s1179
      %s1181 = sshll.u32 [#allocation3], 4
      %s1182 = int_to_ptr.vmem [resolvable:$true] %s1181
      %1187 = dma.vmem_to_hbm [thread:$0]  %s1182, 1024, %s7, [#allocation4], 128, 128, 8
    $region33: #{tpu_custom_call.1} parent=1 // pred_fallthru
      _
    // Predicated region
    $region34: #{tpu_custom_call.1} parent=1 // pred_check
      _
    $region35: #{tpu_custom_call.1} parent=1 // pred_check_branch
      %1189 = sbr.rel (0) target = $region37
    $region36: #{tpu_custom_call.1} parent=1 // pred_region
      %1190 = dma.done [#allocation4], 1024
    $region37: #{tpu_custom_call.1} parent=1 // pred_fallthru
      _
    %1191 = vsyncpa [#allocation4], 1

</llo_original>
